<compile_context>
chip_gen: v5e
topology: v5e:2x2
jax: 0.10.0
libtpu: 0.0.40
codegen_flags: <defaults>
</compile_context>

<pallas_src>
import functools

import jax
import jax.numpy as jnp
import numpy as np
from jax.experimental import pallas as pl
from jax.experimental.pallas import tpu as pltpu

BN_EPS = 1e-5


# --------------------------------------------------------------------------------------
# In-kernel building blocks (traced Python, everything stays in vregs/VMEM)
# --------------------------------------------------------------------------------------
def _bn_train(h, mean_row, gamma, beta, eps=BN_EPS):
    """Training-mode BatchNorm1d over the token axis (rows) of a (B*L, C) matrix.

    Statistics are computed with MXU row-matmuls (mean_row is a precomputed (1, B*L) row of
    1/(B*L)) and a single pass over h: var = E[h^2] - E[h]^2, all in f32.
    """
    m = jnp.dot(mean_row, h, preferred_element_type=jnp.float32)         # (1, C)
    msq = jnp.dot(mean_row, h * h, preferred_element_type=jnp.float32)   # (1, C)
    var = jnp.maximum(msq - m * m, 0.0)
    return (h - m) * jax.lax.rsqrt(var + eps) * gamma + beta


def _se_block(x, pool, expand, mean_row, w1, w2, wf1, wf2, vec, wd):
    """One SEBasicBlock on a (B*L, Cin) token matrix -> (B*L, Cout).

    vec rows: [b1, g1, be1, b2, g2, be2] (+ [gd, bed] if wd is not None).
    """
    b1, g1, be1 = vec[0:1, :], vec[1:2, :], vec[2:3, :]
    b2, g2, be2 = vec[3:4, :], vec[4:5, :], vec[5:6, :]

    # conv1 (1x1, bias) + BN1 + ReLU
    h = jnp.dot(x, w1, preferred_element_type=jnp.float32) + b1
    h = jnp.maximum(_bn_train(h, mean_row, g1, be1), 0.0)

    # conv2 (1x1, bias) + BN2
    h = jnp.dot(h, w2, preferred_element_type=jnp.float32) + b2
    h = _bn_train(h, mean_row, g2, be2)

    # Squeeze-and-Excitation: mean over L (per sample) -> FC -> ReLU -> FC -> sigmoid -> rescale
    y = jnp.dot(pool, h, preferred_element_type=jnp.float32)             # (B, Cout)
    y = jnp.maximum(jnp.dot(y, wf1, preferred_element_type=jnp.float32), 0.0)
    y = jax.nn.sigmoid(jnp.dot(y, wf2, preferred_element_type=jnp.float32))
    h = h * jnp.dot(expand, y, preferred_element_type=jnp.float32)       # broadcast gate to tokens

    # residual branch (downsample = 1x1 conv no-bias + BN, else identity)
    if wd is not None:
        gd, bed = vec[6:7, :], vec[7:8, :]
        residual = _bn_train(jnp.dot(x, wd, preferred_element_type=jnp.float32),
                             mean_row, gd, bed)
    else:
        residual = x                                                      # Cin == Cout here

    return jnp.maximum(h + residual, 0.0)


# --------------------------------------------------------------------------------------
# Fused Pallas kernel: the whole SEResNet (all blocks) in one grid-less call
# --------------------------------------------------------------------------------------
def se_resnet_kernel(*refs, num_batch, block_has_ds):
    x_ref, pool_stack_ref, expand_ref = refs[:3]
    o_ref = refs[-1]
    param_refs = refs[3:-1]

    ps = pool_stack_ref[...]                                 # (B+1, B*L)
    pool = ps[:num_batch, :]                                 # (B, B*L): per-sample mean over L
    mean_row = ps[num_batch:num_batch + 1, :]                # (1, B*L): mean over all tokens (BN)
    expand = expand_ref[...]                                 # (B*L, B): token <- sample broadcast

    h = x_ref[...]                                           # (B*L, Cin)
    idx = 0
    for has_ds in block_has_ds:
        if has_ds:
            w1, w2, wf1, wf2, wd, vec = param_refs[idx:idx + 6]
            idx += 6
            wd_arr = wd[...]
        else:
            w1, w2, wf1, wf2, vec = param_refs[idx:idx + 5]
            idx += 5
            wd_arr = None
        h = _se_block(h, pool, expand, mean_row,
                      w1[...], w2[...], wf1[...], wf2[...], vec[...], wd_arr)

    # Cout=32 < 128 lanes -> masked final store; acceptable: it's the single output store.
    o_ref[...] = h


# --------------------------------------------------------------------------------------
# Host-side one-time preparation (hoisted out of the per-call path)
# --------------------------------------------------------------------------------------
def make_pool_constants(B, L):
    """pool (per-sample mean over L), mean_row (mean over all tokens), expand (broadcast back)."""
    pool = np.kron(np.eye(B, dtype=np.float32), np.ones((1, L), np.float32)) / float(L)
    mean_row = np.full((1, B * L), 1.0 / float(B * L), np.float32)
    pool_stack = np.concatenate([pool, mean_row], axis=0)      # (B+1, B*L)
    expand = (pool.T * float(L)).astype(np.float32)            # (B*L, B)
    return jnp.asarray(pool_stack), jnp.asarray(expand)


def prepare_params(raw_blocks):
    """Transpose/cast weights once and pack all per-channel vectors of a block into one array."""
    flat, flags = [], []
    for p, has_ds in raw_blocks:
        flat.append(jnp.asarray(np.asarray(p["w1"]).T, jnp.float32))
        flat.append(jnp.asarray(np.asarray(p["w2"]).T, jnp.float32))
        flat.append(jnp.asarray(np.asarray(p["wf1"]).T, jnp.float32))
        flat.append(jnp.asarray(np.asarray(p["wf2"]).T, jnp.float32))
        if has_ds:
            flat.append(jnp.asarray(np.asarray(p["wd"]).T, jnp.float32))
        rows = [p["b1"], p["g1"], p["be1"], p["b2"], p["g2"], p["be2"]]
        if has_ds:
            rows += [p["gd"], p["bed"]]
        flat.append(jnp.stack([jnp.asarray(r, jnp.float32) for r in rows], axis=0))
        flags.append(bool(has_ds))
    return flat, tuple(flags)


# --------------------------------------------------------------------------------------
# Jitted forward: one transpose in, one pallas_call, one transpose out
# --------------------------------------------------------------------------------------
def se_resnet_forward(x_ncl, pool_stack, expand, flat_params, *, block_has_ds):
    B, Cin, L = x_ncl.shape
    M = B * L
    Cout = flat_params[-1].shape[1]                 # last entry is the packed (K, Cout) vec

    # NCL -> (B*L, C) channels-last token matrix (done once for the whole net)
    x2 = jnp.transpose(x_ncl, (0, 2, 1)).reshape(M, Cin).astype(jnp.float32)

    vmem = pl.BlockSpec(memory_space=pltpu.MemorySpace.VMEM)
    out2 = pl.pallas_call(
        functools.partial(se_resnet_kernel, num_batch=B, block_has_ds=block_has_ds),
        out_shape=jax.ShapeDtypeStruct((M, Cout), jnp.float32),
        in_specs=[vmem] * (3 + len(flat_params)),
        out_specs=vmem,
    )(x2, pool_stack, expand, *flat_params)

    # (B*L, Cout) -> NCL (done once for the whole net)
    return out2.reshape(B, L, Cout).transpose(0, 2, 1)


# --------------------------------------------------------------------------------------
# Deterministic parameter init (shapes follow the PyTorch __init__)
# --------------------------------------------------------------------------------------
def init_block(key, cin, cout, reduction=16, with_downsample=False):
    cred = max(cout // reduction, 1)
    ks = jax.random.split(key, 12)
    p = {
        "w1": 0.05 * jax.random.normal(ks[0], (cout, cin), jnp.float32),
        "b1": 0.05 * jax.random.normal(ks[1], (cout,), jnp.float32),
        "g1": 1.0 + 0.1 * jax.random.normal(ks[2], (cout,), jnp.float32),
        "be1": 0.1 * jax.random.normal(ks[3], (cout,), jnp.float32),
        "w2": 0.05 * jax.random.normal(ks[4], (cout, cout), jnp.float32),
        "b2": 0.05 * jax.random.normal(ks[5], (cout,), jnp.float32),
        "g2": 1.0 + 0.1 * jax.random.normal(ks[6], (cout,), jnp.float32),
        "be2": 0.1 * jax.random.normal(ks[7], (cout,), jnp.float32),
        "wf1": 0.2 * jax.random.normal(ks[8], (cred, cout), jnp.float32),
        "wf2": 0.2 * jax.random.normal(ks[9], (cout, cred), jnp.float32),
    }
    if with_downsample:
        p["wd"] = 0.05 * jax.random.normal(ks[10], (cout, cin), jnp.float32)
        p["gd"] = 1.0 + 0.1 * jax.random.normal(ks[11], (cout,), jnp.float32)
        p["bed"] = jnp.zeros((cout,), jnp.float32)
    return p


# --------------------------------------------------------------------------------------
# Pure-JAX reference (mirrors the PyTorch forward, NCL layout) for a correctness check
# --------------------------------------------------------------------------------------
def ref_block(x, p, has_downsample):
    def conv1x1(x, w, b=None):
        out = jnp.einsum("oc,bcl->bol", w, x)
        if b is not None:
            out = out + b[None, :, None]
        return out

    def bn(x, g, be, eps=BN_EPS):
        mean = jnp.mean(x, axis=(0, 2), keepdims=True)
        var = jnp.mean((x - mean) ** 2, axis=(0, 2), keepdims=True)
        return (x - mean) / jnp.sqrt(var + eps) * g[None, :, None] + be[None, :, None]

    out = jax.nn.relu(bn(conv1x1(x, p["w1"], p["b1"]), p["g1"], p["be1"]))
    out = bn(conv1x1(out, p["w2"], p["b2"]), p["g2"], p["be2"])
    y = jnp.mean(out, axis=2)                       # (B, C)
    y = jax.nn.relu(y @ p["wf1"].T)
    y = jax.nn.sigmoid(y @ p["wf2"].T)
    out = out * y[:, :, None]
    residual = bn(conv1x1(x, p["wd"]), p["gd"], p["bed"]) if has_downsample else x
    return jax.nn.relu(out + residual)


def ref_forward(x, blocks):
    out = x
    for p, has_ds in blocks:
        out = ref_block(out, p, has_ds)
    return out


# --------------------------------------------------------------------------------------
if __name__ == "__main__":
    key = jax.random.PRNGKey(0)
    k_x, k_b0, k_b1 = jax.random.split(key, 3)

    # SEResNet(output_channels=32, block_size=2); input channels are fixed at 192 by the module.
    B, CIN, L = 2, 192, 16
    COUT, BLOCK_SIZE = 32, 2

    x = jax.random.normal(k_x, (B, CIN, L), jnp.float32)

    raw_blocks = [
        (init_block(k_b0, CIN, COUT, with_downsample=True), True),    # 192 -> 32, downsample path
        (init_block(k_b1, COUT, COUT, with_downsample=False), False), # 32 -> 32, identity residual
    ]
    assert BLOCK_SIZE == len(raw_blocks)

    # One-time constant prep (hoisted out of the per-call path), then jit the fused forward.
    flat_params, flags = prepare_params(raw_blocks)
    pool_stack, expand = make_pool_constants(B, L)
    fwd = jax.jit(se_resnet_forward, static_argnames=("block_has_ds",))

    out = fwd(x, pool_stack, expand, flat_params, block_has_ds=flags)
    out = jax.block_until_ready(out)

    ref = jax.block_until_ready(ref_forward(x, raw_blocks))
    np.testing.assert_allclose(np.asarray(out), np.asarray(ref), rtol=1e-4, atol=1e-4)

    assert out.shape == (B, COUT, L)
    print("KERNEL_OK")
</pallas_src>

<mosaic_0001>
module attributes {stable_mosaic.version = 11 : i64} {
  func.func @se_resnet_kernel(%arg0: memref<32x192xf32, #tpu.memory_space<vmem>>, %arg1: memref<3x32xf32, #tpu.memory_space<vmem>>, %arg2: memref<32x2xf32, #tpu.memory_space<vmem>>, %arg3: memref<192x32xf32, #tpu.memory_space<vmem>>, %arg4: memref<32x32xf32, #tpu.memory_space<vmem>>, %arg5: memref<32x2xf32, #tpu.memory_space<vmem>>, %arg6: memref<2x32xf32, #tpu.memory_space<vmem>>, %arg7: memref<192x32xf32, #tpu.memory_space<vmem>>, %arg8: memref<8x32xf32, #tpu.memory_space<vmem>>, %arg9: memref<32x32xf32, #tpu.memory_space<vmem>>, %arg10: memref<32x32xf32, #tpu.memory_space<vmem>>, %arg11: memref<32x2xf32, #tpu.memory_space<vmem>>, %arg12: memref<2x32xf32, #tpu.memory_space<vmem>>, %arg13: memref<6x32xf32, #tpu.memory_space<vmem>>, %arg14: memref<32x32xf32, #tpu.memory_space<vmem>>) attributes {dimension_semantics = [], scalar_prefetch = 0 : i64, scratch_operands = 0 : i64, tpu.core_type = #tpu.core_type<tc>} {
    %c0 = arith.constant 0 : index
    %c0_0 = arith.constant 0 : index
    %0 = vector.load %arg1[%c0, %c0_0] : memref<3x32xf32, #tpu.memory_space<vmem>>, vector<3x32xf32>
    %1 = vector.extract_strided_slice %0 {offsets = [0, 0], sizes = [2, 32], strides = [1, 1]} : vector<3x32xf32> to vector<2x32xf32>
    %2 = vector.extract_strided_slice %0 {offsets = [2, 0], sizes = [1, 32], strides = [1, 1]} : vector<3x32xf32> to vector<1x32xf32>
    %c0_1 = arith.constant 0 : index
    %c0_2 = arith.constant 0 : index
    %3 = vector.load %arg2[%c0_1, %c0_2] : memref<32x2xf32, #tpu.memory_space<vmem>>, vector<32x2xf32>
    %c0_3 = arith.constant 0 : index
    %c0_4 = arith.constant 0 : index
    %4 = vector.load %arg0[%c0_3, %c0_4] : memref<32x192xf32, #tpu.memory_space<vmem>>, vector<32x192xf32>
    %c0_5 = arith.constant 0 : index
    %c0_6 = arith.constant 0 : index
    %5 = vector.load %arg7[%c0_5, %c0_6] : memref<192x32xf32, #tpu.memory_space<vmem>>, vector<192x32xf32>
    %c0_7 = arith.constant 0 : index
    %c0_8 = arith.constant 0 : index
    %6 = vector.load %arg3[%c0_7, %c0_8] : memref<192x32xf32, #tpu.memory_space<vmem>>, vector<192x32xf32>
    %c0_9 = arith.constant 0 : index
    %c0_10 = arith.constant 0 : index
    %7 = vector.load %arg4[%c0_9, %c0_10] : memref<32x32xf32, #tpu.memory_space<vmem>>, vector<32x32xf32>
    %c0_11 = arith.constant 0 : index
    %c0_12 = arith.constant 0 : index
    %8 = vector.load %arg5[%c0_11, %c0_12] : memref<32x2xf32, #tpu.memory_space<vmem>>, vector<32x2xf32>
    %c0_13 = arith.constant 0 : index
    %c0_14 = arith.constant 0 : index
    %9 = vector.load %arg6[%c0_13, %c0_14] : memref<2x32xf32, #tpu.memory_space<vmem>>, vector<2x32xf32>
    %c0_15 = arith.constant 0 : index
    %c0_16 = arith.constant 0 : index
    %10 = vector.load %arg8[%c0_15, %c0_16] : memref<8x32xf32, #tpu.memory_space<vmem>>, vector<8x32xf32>
    %11 = vector.extract_strided_slice %10 {offsets = [0, 0], sizes = [1, 32], strides = [1, 1]} : vector<8x32xf32> to vector<1x32xf32>
    %12 = vector.extract_strided_slice %10 {offsets = [1, 0], sizes = [1, 32], strides = [1, 1]} : vector<8x32xf32> to vector<1x32xf32>
    %13 = vector.extract_strided_slice %10 {offsets = [2, 0], sizes = [1, 32], strides = [1, 1]} : vector<8x32xf32> to vector<1x32xf32>
    %14 = vector.extract_strided_slice %10 {offsets = [3, 0], sizes = [1, 32], strides = [1, 1]} : vector<8x32xf32> to vector<1x32xf32>
    %15 = vector.extract_strided_slice %10 {offsets = [4, 0], sizes = [1, 32], strides = [1, 1]} : vector<8x32xf32> to vector<1x32xf32>
    %16 = vector.extract_strided_slice %10 {offsets = [5, 0], sizes = [1, 32], strides = [1, 1]} : vector<8x32xf32> to vector<1x32xf32>
    %cst = arith.constant dense<0.000000e+00> : vector<32x32xf32>
    %17 = tpu.matmul %4, %6, %cst {dimension_numbers = #tpu.dot_dimension_numbers<[1], [0], [0], [1], [0, 0, 1, 1], [], []>} : vector<32x192xf32>, vector<192x32xf32>, vector<32x32xf32> -> vector<32x32xf32>
    %18 = vector.broadcast %11 : vector<1x32xf32> to vector<32x32xf32>
    %19 = arith.addf %17, %18 : vector<32x32xf32>
    %cst_17 = arith.constant dense<0.000000e+00> : vector<1x32xf32>
    %20 = tpu.matmul %2, %19, %cst_17 {dimension_numbers = #tpu.dot_dimension_numbers<[1], [0], [0], [1], [0, 0, 1, 1], [], []>} : vector<1x32xf32>, vector<32x32xf32>, vector<1x32xf32> -> vector<1x32xf32>
    %21 = arith.mulf %19, %19 : vector<32x32xf32>
    %cst_18 = arith.constant dense<0.000000e+00> : vector<1x32xf32>
    %22 = tpu.matmul %2, %21, %cst_18 {dimension_numbers = #tpu.dot_dimension_numbers<[1], [0], [0], [1], [0, 0, 1, 1], [], []>} : vector<1x32xf32>, vector<32x32xf32>, vector<1x32xf32> -> vector<1x32xf32>
    %23 = arith.mulf %20, %20 : vector<1x32xf32>
    %24 = arith.subf %22, %23 : vector<1x32xf32>
    %cst_19 = arith.constant 0.000000e+00 : f32
    %25 = vector.broadcast %cst_19 : f32 to vector<1x32xf32>
    %26 = arith.maximumf %24, %25 : vector<1x32xf32>
    %27 = vector.broadcast %20 : vector<1x32xf32> to vector<32x32xf32>
    %28 = arith.subf %19, %27 : vector<32x32xf32>
    %cst_20 = arith.constant 9.99999974E-6 : f32
    %29 = vector.broadcast %cst_20 : f32 to vector<1x32xf32>
    %30 = arith.addf %26, %29 : vector<1x32xf32>
    %31 = math.rsqrt %30 : vector<1x32xf32>
    %32 = vector.broadcast %31 : vector<1x32xf32> to vector<32x32xf32>
    %33 = arith.mulf %28, %32 : vector<32x32xf32>
    %34 = vector.broadcast %12 : vector<1x32xf32> to vector<32x32xf32>
    %35 = arith.mulf %33, %34 : vector<32x32xf32>
    %36 = vector.broadcast %13 : vector<1x32xf32> to vector<32x32xf32>
    %37 = arith.addf %35, %36 : vector<32x32xf32>
    %cst_21 = arith.constant 0.000000e+00 : f32
    %38 = vector.broadcast %cst_21 : f32 to vector<32x32xf32>
    %39 = arith.maximumf %37, %38 : vector<32x32xf32>
    %cst_22 = arith.constant dense<0.000000e+00> : vector<32x32xf32>
    %40 = tpu.matmul %39, %7, %cst_22 {dimension_numbers = #tpu.dot_dimension_numbers<[1], [0], [0], [1], [0, 0, 1, 1], [], []>} : vector<32x32xf32>, vector<32x32xf32>, vector<32x32xf32> -> vector<32x32xf32>
    %41 = vector.broadcast %14 : vector<1x32xf32> to vector<32x32xf32>
    %42 = arith.addf %40, %41 : vector<32x32xf32>
    %cst_23 = arith.constant dense<0.000000e+00> : vector<1x32xf32>
    %43 = tpu.matmul %2, %42, %cst_23 {dimension_numbers = #tpu.dot_dimension_numbers<[1], [0], [0], [1], [0, 0, 1, 1], [], []>} : vector<1x32xf32>, vector<32x32xf32>, vector<1x32xf32> -> vector<1x32xf32>
    %44 = arith.mulf %42, %42 : vector<32x32xf32>
    %cst_24 = arith.constant dense<0.000000e+00> : vector<1x32xf32>
    %45 = tpu.matmul %2, %44, %cst_24 {dimension_numbers = #tpu.dot_dimension_numbers<[1], [0], [0], [1], [0, 0, 1, 1], [], []>} : vector<1x32xf32>, vector<32x32xf32>, vector<1x32xf32> -> vector<1x32xf32>
    %46 = arith.mulf %43, %43 : vector<1x32xf32>
    %47 = arith.subf %45, %46 : vector<1x32xf32>
    %cst_25 = arith.constant 0.000000e+00 : f32
    %48 = vector.broadcast %cst_25 : f32 to vector<1x32xf32>
    %49 = arith.maximumf %47, %48 : vector<1x32xf32>
    %50 = vector.broadcast %43 : vector<1x32xf32> to vector<32x32xf32>
    %51 = arith.subf %42, %50 : vector<32x32xf32>
    %cst_26 = arith.constant 9.99999974E-6 : f32
    %52 = vector.broadcast %cst_26 : f32 to vector<1x32xf32>
    %53 = arith.addf %49, %52 : vector<1x32xf32>
    %54 = math.rsqrt %53 : vector<1x32xf32>
    %55 = vector.broadcast %54 : vector<1x32xf32> to vector<32x32xf32>
    %56 = arith.mulf %51, %55 : vector<32x32xf32>
    %57 = vector.broadcast %15 : vector<1x32xf32> to vector<32x32xf32>
    %58 = arith.mulf %56, %57 : vector<32x32xf32>
    %59 = vector.broadcast %16 : vector<1x32xf32> to vector<32x32xf32>
    %60 = arith.addf %58, %59 : vector<32x32xf32>
    %cst_27 = arith.constant dense<0.000000e+00> : vector<2x32xf32>
    %61 = tpu.matmul %1, %60, %cst_27 {dimension_numbers = #tpu.dot_dimension_numbers<[1], [0], [0], [1], [0, 0, 1, 1], [], []>} : vector<2x32xf32>, vector<32x32xf32>, vector<2x32xf32> -> vector<2x32xf32>
    %cst_28 = arith.constant dense<0.000000e+00> : vector<2x2xf32>
    %62 = tpu.matmul %61, %8, %cst_28 {dimension_numbers = #tpu.dot_dimension_numbers<[1], [0], [0], [1], [0, 0, 1, 1], [], []>} : vector<2x32xf32>, vector<32x2xf32>, vector<2x2xf32> -> vector<2x2xf32>
    %cst_29 = arith.constant 0.000000e+00 : f32
    %63 = vector.broadcast %cst_29 : f32 to vector<2x2xf32>
    %64 = arith.maximumf %62, %63 : vector<2x2xf32>
    %cst_30 = arith.constant dense<0.000000e+00> : vector<2x32xf32>
    %65 = tpu.matmul %64, %9, %cst_30 {dimension_numbers = #tpu.dot_dimension_numbers<[1], [0], [0], [1], [0, 0, 1, 1], [], []>} : vector<2x2xf32>, vector<2x32xf32>, vector<2x32xf32> -> vector<2x32xf32>
    %66 = arith.negf %65 : vector<2x32xf32>
    %67 = math.exp %66 : vector<2x32xf32>
    %cst_31 = arith.constant 1.000000e+00 : f32
    %68 = vector.broadcast %cst_31 : f32 to vector<2x32xf32>
    %69 = arith.addf %68, %67 : vector<2x32xf32>
    %70 = arith.divf %68, %69 : vector<2x32xf32>
    %cst_32 = arith.constant dense<0.000000e+00> : vector<32x32xf32>
    %71 = tpu.matmul %3, %70, %cst_32 {dimension_numbers = #tpu.dot_dimension_numbers<[1], [0], [0], [1], [0, 0, 1, 1], [], []>} : vector<32x2xf32>, vector<2x32xf32>, vector<32x32xf32> -> vector<32x32xf32>
    %72 = arith.mulf %60, %71 : vector<32x32xf32>
    %73 = vector.extract_strided_slice %10 {offsets = [6, 0], sizes = [1, 32], strides = [1, 1]} : vector<8x32xf32> to vector<1x32xf32>
    %74 = vector.extract_strided_slice %10 {offsets = [7, 0], sizes = [1, 32], strides = [1, 1]} : vector<8x32xf32> to vector<1x32xf32>
    %cst_33 = arith.constant dense<0.000000e+00> : vector<32x32xf32>
    %75 = tpu.matmul %4, %5, %cst_33 {dimension_numbers = #tpu.dot_dimension_numbers<[1], [0], [0], [1], [0, 0, 1, 1], [], []>} : vector<32x192xf32>, vector<192x32xf32>, vector<32x32xf32> -> vector<32x32xf32>
    %cst_34 = arith.constant dense<0.000000e+00> : vector<1x32xf32>
    %76 = tpu.matmul %2, %75, %cst_34 {dimension_numbers = #tpu.dot_dimension_numbers<[1], [0], [0], [1], [0, 0, 1, 1], [], []>} : vector<1x32xf32>, vector<32x32xf32>, vector<1x32xf32> -> vector<1x32xf32>
    %77 = arith.mulf %75, %75 : vector<32x32xf32>
    %cst_35 = arith.constant dense<0.000000e+00> : vector<1x32xf32>
    %78 = tpu.matmul %2, %77, %cst_35 {dimension_numbers = #tpu.dot_dimension_numbers<[1], [0], [0], [1], [0, 0, 1, 1], [], []>} : vector<1x32xf32>, vector<32x32xf32>, vector<1x32xf32> -> vector<1x32xf32>
    %79 = arith.mulf %76, %76 : vector<1x32xf32>
    %80 = arith.subf %78, %79 : vector<1x32xf32>
    %cst_36 = arith.constant 0.000000e+00 : f32
    %81 = vector.broadcast %cst_36 : f32 to vector<1x32xf32>
    %82 = arith.maximumf %80, %81 : vector<1x32xf32>
    %83 = vector.broadcast %76 : vector<1x32xf32> to vector<32x32xf32>
    %84 = arith.subf %75, %83 : vector<32x32xf32>
    %cst_37 = arith.constant 9.99999974E-6 : f32
    %85 = vector.broadcast %cst_37 : f32 to vector<1x32xf32>
    %86 = arith.addf %82, %85 : vector<1x32xf32>
    %87 = math.rsqrt %86 : vector<1x32xf32>
    %88 = vector.broadcast %87 : vector<1x32xf32> to vector<32x32xf32>
    %89 = arith.mulf %84, %88 : vector<32x32xf32>
    %90 = vector.broadcast %73 : vector<1x32xf32> to vector<32x32xf32>
    %91 = arith.mulf %89, %90 : vector<32x32xf32>
    %92 = vector.broadcast %74 : vector<1x32xf32> to vector<32x32xf32>
    %93 = arith.addf %91, %92 : vector<32x32xf32>
    %94 = arith.addf %72, %93 : vector<32x32xf32>
    %cst_38 = arith.constant 0.000000e+00 : f32
    %95 = vector.broadcast %cst_38 : f32 to vector<32x32xf32>
    %96 = arith.maximumf %94, %95 : vector<32x32xf32>
    %c0_39 = arith.constant 0 : index
    %c0_40 = arith.constant 0 : index
    %97 = vector.load %arg9[%c0_39, %c0_40] : memref<32x32xf32, #tpu.memory_space<vmem>>, vector<32x32xf32>
    %c0_41 = arith.constant 0 : index
    %c0_42 = arith.constant 0 : index
    %98 = vector.load %arg10[%c0_41, %c0_42] : memref<32x32xf32, #tpu.memory_space<vmem>>, vector<32x32xf32>
    %c0_43 = arith.constant 0 : index
    %c0_44 = arith.constant 0 : index
    %99 = vector.load %arg11[%c0_43, %c0_44] : memref<32x2xf32, #tpu.memory_space<vmem>>, vector<32x2xf32>
    %c0_45 = arith.constant 0 : index
    %c0_46 = arith.constant 0 : index
    %100 = vector.load %arg12[%c0_45, %c0_46] : memref<2x32xf32, #tpu.memory_space<vmem>>, vector<2x32xf32>
    %c0_47 = arith.constant 0 : index
    %c0_48 = arith.constant 0 : index
    %101 = vector.load %arg13[%c0_47, %c0_48] : memref<6x32xf32, #tpu.memory_space<vmem>>, vector<6x32xf32>
    %102 = vector.extract_strided_slice %101 {offsets = [0, 0], sizes = [1, 32], strides = [1, 1]} : vector<6x32xf32> to vector<1x32xf32>
    %103 = vector.extract_strided_slice %101 {offsets = [1, 0], sizes = [1, 32], strides = [1, 1]} : vector<6x32xf32> to vector<1x32xf32>
    %104 = vector.extract_strided_slice %101 {offsets = [2, 0], sizes = [1, 32], strides = [1, 1]} : vector<6x32xf32> to vector<1x32xf32>
    %105 = vector.extract_strided_slice %101 {offsets = [3, 0], sizes = [1, 32], strides = [1, 1]} : vector<6x32xf32> to vector<1x32xf32>
    %106 = vector.extract_strided_slice %101 {offsets = [4, 0], sizes = [1, 32], strides = [1, 1]} : vector<6x32xf32> to vector<1x32xf32>
    %107 = vector.extract_strided_slice %101 {offsets = [5, 0], sizes = [1, 32], strides = [1, 1]} : vector<6x32xf32> to vector<1x32xf32>
    %cst_49 = arith.constant dense<0.000000e+00> : vector<32x32xf32>
    %108 = tpu.matmul %96, %97, %cst_49 {dimension_numbers = #tpu.dot_dimension_numbers<[1], [0], [0], [1], [0, 0, 1, 1], [], []>} : vector<32x32xf32>, vector<32x32xf32>, vector<32x32xf32> -> vector<32x32xf32>
    %109 = vector.broadcast %102 : vector<1x32xf32> to vector<32x32xf32>
    %110 = arith.addf %108, %109 : vector<32x32xf32>
    %cst_50 = arith.constant dense<0.000000e+00> : vector<1x32xf32>
    %111 = tpu.matmul %2, %110, %cst_50 {dimension_numbers = #tpu.dot_dimension_numbers<[1], [0], [0], [1], [0, 0, 1, 1], [], []>} : vector<1x32xf32>, vector<32x32xf32>, vector<1x32xf32> -> vector<1x32xf32>
    %112 = arith.mulf %110, %110 : vector<32x32xf32>
    %cst_51 = arith.constant dense<0.000000e+00> : vector<1x32xf32>
    %113 = tpu.matmul %2, %112, %cst_51 {dimension_numbers = #tpu.dot_dimension_numbers<[1], [0], [0], [1], [0, 0, 1, 1], [], []>} : vector<1x32xf32>, vector<32x32xf32>, vector<1x32xf32> -> vector<1x32xf32>
    %114 = arith.mulf %111, %111 : vector<1x32xf32>
    %115 = arith.subf %113, %114 : vector<1x32xf32>
    %cst_52 = arith.constant 0.000000e+00 : f32
    %116 = vector.broadcast %cst_52 : f32 to vector<1x32xf32>
    %117 = arith.maximumf %115, %116 : vector<1x32xf32>
    %118 = vector.broadcast %111 : vector<1x32xf32> to vector<32x32xf32>
    %119 = arith.subf %110, %118 : vector<32x32xf32>
    %cst_53 = arith.constant 9.99999974E-6 : f32
    %120 = vector.broadcast %cst_53 : f32 to vector<1x32xf32>
    %121 = arith.addf %117, %120 : vector<1x32xf32>
    %122 = math.rsqrt %121 : vector<1x32xf32>
    %123 = vector.broadcast %122 : vector<1x32xf32> to vector<32x32xf32>
    %124 = arith.mulf %119, %123 : vector<32x32xf32>
    %125 = vector.broadcast %103 : vector<1x32xf32> to vector<32x32xf32>
    %126 = arith.mulf %124, %125 : vector<32x32xf32>
    %127 = vector.broadcast %104 : vector<1x32xf32> to vector<32x32xf32>
    %128 = arith.addf %126, %127 : vector<32x32xf32>
    %cst_54 = arith.constant 0.000000e+00 : f32
    %129 = vector.broadcast %cst_54 : f32 to vector<32x32xf32>
    %130 = arith.maximumf %128, %129 : vector<32x32xf32>
    %cst_55 = arith.constant dense<0.000000e+00> : vector<32x32xf32>
    %131 = tpu.matmul %130, %98, %cst_55 {dimension_numbers = #tpu.dot_dimension_numbers<[1], [0], [0], [1], [0, 0, 1, 1], [], []>} : vector<32x32xf32>, vector<32x32xf32>, vector<32x32xf32> -> vector<32x32xf32>
    %132 = vector.broadcast %105 : vector<1x32xf32> to vector<32x32xf32>
    %133 = arith.addf %131, %132 : vector<32x32xf32>
    %cst_56 = arith.constant dense<0.000000e+00> : vector<1x32xf32>
    %134 = tpu.matmul %2, %133, %cst_56 {dimension_numbers = #tpu.dot_dimension_numbers<[1], [0], [0], [1], [0, 0, 1, 1], [], []>} : vector<1x32xf32>, vector<32x32xf32>, vector<1x32xf32> -> vector<1x32xf32>
    %135 = arith.mulf %133, %133 : vector<32x32xf32>
    %cst_57 = arith.constant dense<0.000000e+00> : vector<1x32xf32>
    %136 = tpu.matmul %2, %135, %cst_57 {dimension_numbers = #tpu.dot_dimension_numbers<[1], [0], [0], [1], [0, 0, 1, 1], [], []>} : vector<1x32xf32>, vector<32x32xf32>, vector<1x32xf32> -> vector<1x32xf32>
    %137 = arith.mulf %134, %134 : vector<1x32xf32>
    %138 = arith.subf %136, %137 : vector<1x32xf32>
    %cst_58 = arith.constant 0.000000e+00 : f32
    %139 = vector.broadcast %cst_58 : f32 to vector<1x32xf32>
    %140 = arith.maximumf %138, %139 : vector<1x32xf32>
    %141 = vector.broadcast %134 : vector<1x32xf32> to vector<32x32xf32>
    %142 = arith.subf %133, %141 : vector<32x32xf32>
    %cst_59 = arith.constant 9.99999974E-6 : f32
    %143 = vector.broadcast %cst_59 : f32 to vector<1x32xf32>
    %144 = arith.addf %140, %143 : vector<1x32xf32>
    %145 = math.rsqrt %144 : vector<1x32xf32>
    %146 = vector.broadcast %145 : vector<1x32xf32> to vector<32x32xf32>
    %147 = arith.mulf %142, %146 : vector<32x32xf32>
    %148 = vector.broadcast %106 : vector<1x32xf32> to vector<32x32xf32>
    %149 = arith.mulf %147, %148 : vector<32x32xf32>
    %150 = vector.broadcast %107 : vector<1x32xf32> to vector<32x32xf32>
    %151 = arith.addf %149, %150 : vector<32x32xf32>
    %cst_60 = arith.constant dense<0.000000e+00> : vector<2x32xf32>
    %152 = tpu.matmul %1, %151, %cst_60 {dimension_numbers = #tpu.dot_dimension_numbers<[1], [0], [0], [1], [0, 0, 1, 1], [], []>} : vector<2x32xf32>, vector<32x32xf32>, vector<2x32xf32> -> vector<2x32xf32>
    %cst_61 = arith.constant dense<0.000000e+00> : vector<2x2xf32>
    %153 = tpu.matmul %152, %99, %cst_61 {dimension_numbers = #tpu.dot_dimension_numbers<[1], [0], [0], [1], [0, 0, 1, 1], [], []>} : vector<2x32xf32>, vector<32x2xf32>, vector<2x2xf32> -> vector<2x2xf32>
    %cst_62 = arith.constant 0.000000e+00 : f32
    %154 = vector.broadcast %cst_62 : f32 to vector<2x2xf32>
    %155 = arith.maximumf %153, %154 : vector<2x2xf32>
    %cst_63 = arith.constant dense<0.000000e+00> : vector<2x32xf32>
    %156 = tpu.matmul %155, %100, %cst_63 {dimension_numbers = #tpu.dot_dimension_numbers<[1], [0], [0], [1], [0, 0, 1, 1], [], []>} : vector<2x2xf32>, vector<2x32xf32>, vector<2x32xf32> -> vector<2x32xf32>
    %157 = arith.negf %156 : vector<2x32xf32>
    %158 = math.exp %157 : vector<2x32xf32>
    %cst_64 = arith.constant 1.000000e+00 : f32
    %159 = vector.broadcast %cst_64 : f32 to vector<2x32xf32>
    %160 = arith.addf %159, %158 : vector<2x32xf32>
    %161 = arith.divf %159, %160 : vector<2x32xf32>
    %cst_65 = arith.constant dense<0.000000e+00> : vector<32x32xf32>
    %162 = tpu.matmul %3, %161, %cst_65 {dimension_numbers = #tpu.dot_dimension_numbers<[1], [0], [0], [1], [0, 0, 1, 1], [], []>} : vector<32x2xf32>, vector<2x32xf32>, vector<32x32xf32> -> vector<32x32xf32>
    %163 = arith.mulf %151, %162 : vector<32x32xf32>
    %164 = arith.addf %163, %96 : vector<32x32xf32>
    %cst_66 = arith.constant 0.000000e+00 : f32
    %165 = vector.broadcast %cst_66 : f32 to vector<32x32xf32>
    %166 = arith.maximumf %164, %165 : vector<32x32xf32>
    %c0_67 = arith.constant 0 : index
    %c0_68 = arith.constant 0 : index
    %167 = vector.load %arg14[%c0_67, %c0_68] : memref<32x32xf32, #tpu.memory_space<vmem>>, vector<32x32xf32>
    tpu.vector_store %arg14[%c0_67, %c0_68], %166 {strides = array<i32>} : memref<32x32xf32, #tpu.memory_space<vmem>>, vector<32x32xf32>,
    return
  }
}

</mosaic_0001>

<llo_original>
// kernel: se_resnet_forward.1
$region0: #{se_resnet_forward.1}
  #allocation0 [shape = 'u32[]', space=smem, size = 0x4, offset = 0x4, fixed_abs, tag = 'smem constant byte address 0x4 - core index']
  #allocation1 [shape = 'u32[72,128]{1,0:T(1,128)}', space=vmem, size = 0x9000, scoped, tag = 'internal scratch']
  %s0 = inlined_call_operand.vmem [shape: f32[32,192], index: 0, kind: input, shape index: {}]
  %s1 = inlined_call_operand.vmem [shape: f32[3,32], index: 1, kind: input, shape index: {}]
  %s2 = inlined_call_operand.vmem [shape: f32[32,2], index: 2, kind: input, shape index: {}]
  %s3 = inlined_call_operand.vmem [shape: f32[192,32], index: 3, kind: input, shape index: {}]
  %s4 = inlined_call_operand.vmem [shape: f32[32,32], index: 4, kind: input, shape index: {}]
  %s5 = inlined_call_operand.vmem [shape: f32[32,2], index: 5, kind: input, shape index: {}]
  %s6 = inlined_call_operand.vmem [shape: f32[2,32], index: 6, kind: input, shape index: {}]
  %s7 = inlined_call_operand.vmem [shape: f32[192,32], index: 7, kind: input, shape index: {}]
  %s8 = inlined_call_operand.vmem [shape: f32[8,32], index: 8, kind: input, shape index: {}]
  %s9 = inlined_call_operand.vmem [shape: f32[32,32], index: 9, kind: input, shape index: {}]
  %s10 = inlined_call_operand.vmem [shape: f32[32,32], index: 10, kind: input, shape index: {}]
  %s11 = inlined_call_operand.vmem [shape: f32[32,2], index: 11, kind: input, shape index: {}]
  %s12 = inlined_call_operand.vmem [shape: f32[2,32], index: 12, kind: input, shape index: {}]
  %s13 = inlined_call_operand.vmem [shape: f32[6,32], index: 13, kind: input, shape index: {}]
  %s14 = inlined_call_operand.hbm [shape: f32[32,32], index: 14, kind: output, shape index: {}]
  %s15 = sld [smem:[#allocation0]]
  $region66: #{se_resnet_forward.1} parent=0
    _
  %s17 = ssub.s32 1, %s15
  %s18 = scalar_select 0, %s17, %s15
  $region1: #{se_resnet_forward.1} parent=0
    #allocation2 [shape = 'u8[16384]{0}', space=vmem, size = 0x4000, scoped, tag = 'output window, operand 0, single buffered']
    #allocation3 [shape = 's32[1]{0}', space=sflag, size = 0x4, scoped, tag = 'scoped memory for se_resnet_forward.1']
    %19 = vsyncpa [#allocation3], 0
    // Predicated region
    $region2: #{se_resnet_forward.1} parent=1 // pred_check
      _
    $region3: #{se_resnet_forward.1} parent=1 // pred_check_branch
      %21 = sbr.rel (0) target = $region5
    $region4: #{se_resnet_forward.1} parent=1 // pred_region
      _
    $region5: #{se_resnet_forward.1} parent=1 // pred_fallthru
      _
    // Predicated region
    $region6: #{se_resnet_forward.1} parent=1 // pred_check
      _
    $region7: #{se_resnet_forward.1} parent=1 // pred_check_branch
      %23 = sbr.rel (0) target = $region9
    $region8: #{se_resnet_forward.1} parent=1 // pred_region
      _
    $region9: #{se_resnet_forward.1} parent=1 // pred_fallthru
      _
    // Predicated region
    $region10: #{se_resnet_forward.1} parent=1 // pred_check
      _
    $region11: #{se_resnet_forward.1} parent=1 // pred_check_branch
      %25 = sbr.rel (0) target = $region13
    $region12: #{se_resnet_forward.1} parent=1 // pred_region
      _
    $region13: #{se_resnet_forward.1} parent=1 // pred_fallthru
      _
    // Predicated region
    $region14: #{se_resnet_forward.1} parent=1 // pred_check
      _
    $region15: #{se_resnet_forward.1} parent=1 // pred_check_branch
      %27 = sbr.rel (0) target = $region17
    $region16: #{se_resnet_forward.1} parent=1 // pred_region
      _
    $region17: #{se_resnet_forward.1} parent=1 // pred_fallthru
      _
    // Predicated region
    $region18: #{se_resnet_forward.1} parent=1 // pred_check
      _
    $region19: #{se_resnet_forward.1} parent=1 // pred_check_branch
      %29 = sbr.rel (0) target = $region21
    $region20: #{se_resnet_forward.1} parent=1 // pred_region
      _
    $region21: #{se_resnet_forward.1} parent=1 // pred_fallthru
      _
    // Predicated region
    $region22: #{se_resnet_forward.1} parent=1 // pred_check
      _
    $region23: #{se_resnet_forward.1} parent=1 // pred_check_branch
      %31 = sbr.rel (0) target = $region25
    $region24: #{se_resnet_forward.1} parent=1 // pred_region
      _
    $region25: #{se_resnet_forward.1} parent=1 // pred_fallthru
      _
    // Predicated region
    $region26: #{se_resnet_forward.1} parent=1 // pred_check
      _
    $region27: #{se_resnet_forward.1} parent=1 // pred_check_branch
      %33 = sbr.rel (0) target = $region29
    $region28: #{se_resnet_forward.1} parent=1 // pred_region
      _
    $region29: #{se_resnet_forward.1} parent=1 // pred_fallthru
      _
    // Predicated region
    $region30: #{se_resnet_forward.1} parent=1 // pred_check
      _
    $region31: #{se_resnet_forward.1} parent=1 // pred_check_branch
      %35 = sbr.rel (0) target = $region33
    $region32: #{se_resnet_forward.1} parent=1 // pred_region
      _
    $region33: #{se_resnet_forward.1} parent=1 // pred_fallthru
      _
    // Predicated region
    $region34: #{se_resnet_forward.1} parent=1 // pred_check
      _
    $region35: #{se_resnet_forward.1} parent=1 // pred_check_branch
      %37 = sbr.rel (0) target = $region37
    $region36: #{se_resnet_forward.1} parent=1 // pred_region
      _
    $region37: #{se_resnet_forward.1} parent=1 // pred_fallthru
      _
    // Predicated region
    $region38: #{se_resnet_forward.1} parent=1 // pred_check
      _
    $region39: #{se_resnet_forward.1} parent=1 // pred_check_branch
      %39 = sbr.rel (0) target = $region41
    $region40: #{se_resnet_forward.1} parent=1 // pred_region
      _
    $region41: #{se_resnet_forward.1} parent=1 // pred_fallthru
      _
    // Predicated region
    $region42: #{se_resnet_forward.1} parent=1 // pred_check
      _
    $region43: #{se_resnet_forward.1} parent=1 // pred_check_branch
      %41 = sbr.rel (0) target = $region45
    $region44: #{se_resnet_forward.1} parent=1 // pred_region
      _
    $region45: #{se_resnet_forward.1} parent=1 // pred_fallthru
      _
    // Predicated region
    $region46: #{se_resnet_forward.1} parent=1 // pred_check
      _
    $region47: #{se_resnet_forward.1} parent=1 // pred_check_branch
      %43 = sbr.rel (0) target = $region49
    $region48: #{se_resnet_forward.1} parent=1 // pred_region
      _
    $region49: #{se_resnet_forward.1} parent=1 // pred_fallthru
      _
    // Predicated region
    $region50: #{se_resnet_forward.1} parent=1 // pred_check
      _
    $region51: #{se_resnet_forward.1} parent=1 // pred_check_branch
      %45 = sbr.rel (0) target = $region53
    $region52: #{se_resnet_forward.1} parent=1 // pred_region
      _
    $region53: #{se_resnet_forward.1} parent=1 // pred_fallthru
      _
    // Predicated region
    $region54: #{se_resnet_forward.1} parent=1 // pred_check
      _
    $region55: #{se_resnet_forward.1} parent=1 // pred_check_branch
      %47 = sbr.rel (0) target = $region57
    $region56: #{se_resnet_forward.1} parent=1 // pred_region
      _
    $region57: #{se_resnet_forward.1} parent=1 // pred_fallthru
      _
    %v48 = vld [vmem:[%s1] sm:$0x7]
    %v49 = vld [vmem:[%s2] sm:$0xff]
    %v50 = vld [vmem:[%s2 + $0x8] sm:$0xff]
    %v51 = vld [vmem:[%s2 + $0x10] sm:$0xff]
    %v52 = vld [vmem:[%s2 + $0x18] sm:$0xff]
    %v53 = vld [vmem:[%s0] sm:$0xff]
    %v54 = vld [vmem:[%s0 + $0x8] sm:$0xff]
    %v55 = vld [vmem:[%s0 + $0x10] sm:$0xff]
    %v56 = vld [vmem:[%s0 + $0x18] sm:$0xff]
    %v57 = vld [vmem:[%s0 + $0x20] sm:$0xff]
    %v58 = vld [vmem:[%s0 + $0x28] sm:$0xff]
    %v59 = vld [vmem:[%s0 + $0x30] sm:$0xff]
    %v60 = vld [vmem:[%s0 + $0x38] sm:$0xff]
    %v61 = vld [vmem:[%s7] sm:$0xff]
    %v62 = vld [vmem:[%s7 + $0x8] sm:$0xff]
    %v63 = vld [vmem:[%s7 + $0x10] sm:$0xff]
    %v64 = vld [vmem:[%s7 + $0x18] sm:$0xff]
    %v65 = vld [vmem:[%s7 + $0x20] sm:$0xff]
    %v66 = vld [vmem:[%s7 + $0x28] sm:$0xff]
    %v67 = vld [vmem:[%s7 + $0x30] sm:$0xff]
    %v68 = vld [vmem:[%s7 + $0x38] sm:$0xff]
    %v69 = vld [vmem:[%s7 + $0x40] sm:$0xff]
    %v70 = vld [vmem:[%s7 + $0x48] sm:$0xff]
    %v71 = vld [vmem:[%s7 + $0x50] sm:$0xff]
    %v72 = vld [vmem:[%s7 + $0x58] sm:$0xff]
    %v73 = vld [vmem:[%s7 + $0x60] sm:$0xff]
    %v74 = vld [vmem:[%s7 + $0x68] sm:$0xff]
    %v75 = vld [vmem:[%s7 + $0x70] sm:$0xff]
    %v76 = vld [vmem:[%s7 + $0x78] sm:$0xff]
    %v77 = vld [vmem:[%s7 + $0x80] sm:$0xff]
    %v78 = vld [vmem:[%s7 + $0x88] sm:$0xff]
    %v79 = vld [vmem:[%s7 + $0x90] sm:$0xff]
    %v80 = vld [vmem:[%s7 + $0x98] sm:$0xff]
    %v81 = vld [vmem:[%s7 + $0xa0] sm:$0xff]
    %v82 = vld [vmem:[%s7 + $0xa8] sm:$0xff]
    %v83 = vld [vmem:[%s7 + $0xb0] sm:$0xff]
    %v84 = vld [vmem:[%s7 + $0xb8] sm:$0xff]
    %v85 = vld [vmem:[%s3] sm:$0xff]
    %v86 = vld [vmem:[%s3 + $0x8] sm:$0xff]
    %v87 = vld [vmem:[%s3 + $0x10] sm:$0xff]
    %v88 = vld [vmem:[%s3 + $0x18] sm:$0xff]
    %v89 = vld [vmem:[%s3 + $0x20] sm:$0xff]
    %v90 = vld [vmem:[%s3 + $0x28] sm:$0xff]
    %v91 = vld [vmem:[%s3 + $0x30] sm:$0xff]
    %v92 = vld [vmem:[%s3 + $0x38] sm:$0xff]
    %v93 = vld [vmem:[%s3 + $0x40] sm:$0xff]
    %v94 = vld [vmem:[%s3 + $0x48] sm:$0xff]
    %v95 = vld [vmem:[%s3 + $0x50] sm:$0xff]
    %v96 = vld [vmem:[%s3 + $0x58] sm:$0xff]
    %v97 = vld [vmem:[%s3 + $0x60] sm:$0xff]
    %v98 = vld [vmem:[%s3 + $0x68] sm:$0xff]
    %v99 = vld [vmem:[%s3 + $0x70] sm:$0xff]
    %v100 = vld [vmem:[%s3 + $0x78] sm:$0xff]
    %v101 = vld [vmem:[%s3 + $0x80] sm:$0xff]
    %v102 = vld [vmem:[%s3 + $0x88] sm:$0xff]
    %v103 = vld [vmem:[%s3 + $0x90] sm:$0xff]
    %v104 = vld [vmem:[%s3 + $0x98] sm:$0xff]
    %v105 = vld [vmem:[%s3 + $0xa0] sm:$0xff]
    %v106 = vld [vmem:[%s3 + $0xa8] sm:$0xff]
    %v107 = vld [vmem:[%s3 + $0xb0] sm:$0xff]
    %v108 = vld [vmem:[%s3 + $0xb8] sm:$0xff]
    %v109 = vld [vmem:[%s4] sm:$0xff]
    %v110 = vld [vmem:[%s4 + $0x8] sm:$0xff]
    %v111 = vld [vmem:[%s4 + $0x10] sm:$0xff]
    %v112 = vld [vmem:[%s4 + $0x18] sm:$0xff]
    %v113 = vld [vmem:[%s5] sm:$0xff]
    %v114 = vld [vmem:[%s5 + $0x8] sm:$0xff]
    %v115 = vld [vmem:[%s5 + $0x10] sm:$0xff]
    %v116 = vld [vmem:[%s5 + $0x18] sm:$0xff]
    %v117 = vld [vmem:[%s6] sm:$0x3]
    %v118 = vld [vmem:[%s8] sm:$0xff]
    %v119 = vperm.slane %v118, 0
    %vm120 = vcmask 523264
    %v122 = vsel %vm120, %v54, 0
    %v125 = vsel %vm120, %v56, 0
    %v128 = vsel %vm120, %v58, 0
    %v131 = vsel %vm120, %v60, 0
    %133 = vmatpush.msra.mxu0 %v100
    %134 = vmatpush.msra.mxu0 %v99
    %135 = vmatpush.msra.mxu0 %v98
    %136 = vmatpush.msra.mxu0 %v97
    %137 = vmatpush.msra.mxu0 %v96
    %138 = vmatpush.msra.mxu0 %v95
    %139 = vmatpush.msra.mxu0 %v94
    %140 = vmatpush.msra.mxu0 %v93
    %141 = vmatpush.msra.mxu0 %v92
    %142 = vmatpush.msra.mxu0 %v91
    %143 = vmatpush.msra.mxu0 %v90
    %144 = vmatpush.msra.mxu0 %v89
    %145 = vmatpush.msra.mxu0 %v88
    %146 = vmatpush.msra.mxu0 %v87
    %147 = vmatpush.msra.mxu0 %v86
    %148 = vmatpush.msra.mxu0 %v85
    %149 = vmatmul.f32.gmra.mxu0 %v53
    %v150 = vpop.f32.mrf.mxu0
    %v151 = vadd.f32 %v119, %v150
    %152 = vmatmul.f32.gmra.mxu0 %v55
    %v153 = vpop.f32.mrf.mxu0
    %v154 = vadd.f32 %v119, %v153
    %155 = vmatmul.f32.gmra.mxu0 %v57
    %v156 = vpop.f32.mrf.mxu0
    %v157 = vadd.f32 %v119, %v156
    %158 = vmatmul.f32.gmra.mxu0 %v59
    %v159 = vpop.f32.mrf.mxu0
    %v160 = vadd.f32 %v119, %v159
    %161 = vdwg.mxu0
    %162 = vmatpush.msra.mxu0 0.0
    %163 = vmatpush.msra.mxu0 0.0
    %164 = vmatpush.msra.mxu0 0.0
    %165 = vmatpush.msra.mxu0 0.0
    %166 = vmatpush.msra.mxu0 0.0
    %167 = vmatpush.msra.mxu0 0.0
    %168 = vmatpush.msra.mxu0 0.0
    %169 = vmatpush.msra.mxu0 0.0
    %170 = vmatpush.msra.mxu0 %v108
    %171 = vmatpush.msra.mxu0 %v107
    %172 = vmatpush.msra.mxu0 %v106
    %173 = vmatpush.msra.mxu0 %v105
    %174 = vmatpush.msra.mxu0 %v104
    %175 = vmatpush.msra.mxu0 %v103
    %176 = vmatpush.msra.mxu0 %v102
    %177 = vmatpush.msra.mxu0 %v101
    %178 = vmatmul.f32.gmra.mxu0 %v122
    %v179 = vpop.f32.mrf.mxu0
    %v180 = vadd.f32 %v151, %v179
    %181 = vmatmul.f32.gmra.mxu0 %v125
    %v182 = vpop.f32.mrf.mxu0
    %v183 = vadd.f32 %v154, %v182
    %184 = vmatmul.f32.gmra.mxu0 %v128
    %v185 = vpop.f32.mrf.mxu0
    %v186 = vadd.f32 %v157, %v185
    %187 = vmatmul.f32.gmra.mxu0 %v131
    %v188 = vpop.f32.mrf.mxu0
    %v189 = vadd.f32 %v160, %v188
    %190 = vdwg.mxu0
    %v192 = vrot.slane %v48, 2
    %vm193 = vcmask 261120
    %v194 = vsel %vm193, %v192, 0
    %196 = vmatpush.msra.mxu0 0.0
    %197 = vmatpush.msra.mxu0 0.0
    %198 = vmatpush.msra.mxu0 0.0
    %199 = vmatpush.msra.mxu0 0.0
    %200 = vmatpush.msra.mxu0 0.0
    %201 = vmatpush.msra.mxu0 0.0
    %202 = vmatpush.msra.mxu0 0.0
    %203 = vmatpush.msra.mxu0 0.0
    %204 = vmatpush.msra.mxu0 0.0
    %205 = vmatpush.msra.mxu0 0.0
    %206 = vmatpush.msra.mxu0 0.0
    %207 = vmatpush.msra.mxu0 0.0
    %208 = vmatpush.msra.mxu0 %v189
    %209 = vmatpush.msra.mxu0 %v186
    %210 = vmatpush.msra.mxu0 %v183
    %211 = vmatpush.msra.mxu0 %v180
    %212 = vmatmul.f32.gmra.mxu0 %v194
    %v213 = vpop.f32.mrf.mxu0
    %v214 = vadd.f32 0.0, %v213
    %215 = vdwg.mxu0
    %v216 = vmul.f32 %v180, %v180
    %v217 = vmul.f32 %v183, %v183
    %v218 = vmul.f32 %v186, %v186
    %v219 = vmul.f32 %v189, %v189
    %220 = vmatpush.msra.mxu0 0.0
    %221 = vmatpush.msra.mxu0 0.0
    %222 = vmatpush.msra.mxu0 0.0
    %223 = vmatpush.msra.mxu0 0.0
    %224 = vmatpush.msra.mxu0 0.0
    %225 = vmatpush.msra.mxu0 0.0
    %226 = vmatpush.msra.mxu0 0.0
    %227 = vmatpush.msra.mxu0 0.0
    %228 = vmatpush.msra.mxu0 0.0
    %229 = vmatpush.msra.mxu0 0.0
    %230 = vmatpush.msra.mxu0 0.0
    %231 = vmatpush.msra.mxu0 0.0
    %232 = vmatpush.msra.mxu0 %v219
    %233 = vmatpush.msra.mxu0 %v218
    %234 = vmatpush.msra.mxu0 %v217
    %235 = vmatpush.msra.mxu0 %v216
    %236 = vmatmul.f32.gmra.mxu0 %v194
    %v237 = vpop.f32.mrf.mxu0
    %v238 = vadd.f32 0.0, %v237
    %239 = vdwg.mxu0
    %v240 = vmul.f32 %v214, %v214
    %v241 = vsub.f32 %v238, %v240
    %v242 = vmax.f32 %v241, 0.0
    %v243 = vperm.slane %v214, 0
    %v244 = vsub.f32 %v180, %v243
    %v245 = vsub.f32 %v183, %v243
    %v246 = vsub.f32 %v186, %v243
    %v247 = vsub.f32 %v189, %v243
    %v248 = vadd.f32 %v242, 1e-05
    %v249 = vrsqrt.pop %v248
    %v250 = vmul.f32 %v249, %v248
    %v251 = vmul.f32 %v250, %v249
    %v252 = vmul.f32 0.5, %v251
    %v253 = vsub.f32 1.5, %v252
    %v254 = vmul.f32 %v249, %v253
    %vm255 = vweird.f32 %v248
    %vm256 = vweird.f32 %v249
    %vm257 = vmor %vm255, %vm256
    %v258 = vsel %vm257, %v249, %v254
    %v259 = vperm.slane %v258, 0
    %v260 = vmul.f32 %v244, %v259
    %v261 = vmul.f32 %v245, %v259
    %v262 = vmul.f32 %v246, %v259
    %v263 = vmul.f32 %v247, %v259
    %v264 = vperm.slane %v118, 1
    %v265 = vmul.f32 %v260, %v264
    %v266 = vmul.f32 %v261, %v264
    %v267 = vmul.f32 %v262, %v264
    %v268 = vmul.f32 %v263, %v264
    %v269 = vperm.slane %v118, 2
    %v270 = vadd.f32 %v265, %v269
    %v271 = vadd.f32 %v266, %v269
    %v272 = vadd.f32 %v267, %v269
    %v273 = vadd.f32 %v268, %v269
    %v274 = vmax.f32 %v270, 0.0
    %v275 = vmax.f32 %v271, 0.0
    %v276 = vmax.f32 %v272, 0.0
    %v277 = vmax.f32 %v273, 0.0
    %v278 = vperm.slane %v118, 3
    %v280 = vsel %vm193, %v274, 0
    %v283 = vsel %vm193, %v275, 0
    %v286 = vsel %vm193, %v276, 0
    %v289 = vsel %vm193, %v277, 0
    %291 = vmatpush.msra.mxu0 0.0
    %292 = vmatpush.msra.mxu0 0.0
    %293 = vmatpush.msra.mxu0 0.0
    %294 = vmatpush.msra.mxu0 0.0
    %295 = vmatpush.msra.mxu0 0.0
    %296 = vmatpush.msra.mxu0 0.0
    %297 = vmatpush.msra.mxu0 0.0
    %298 = vmatpush.msra.mxu0 0.0
    %299 = vmatpush.msra.mxu0 0.0
    %300 = vmatpush.msra.mxu0 0.0
    %301 = vmatpush.msra.mxu0 0.0
    %302 = vmatpush.msra.mxu0 0.0
    %303 = vmatpush.msra.mxu0 %v112
    %304 = vmatpush.msra.mxu0 %v111
    %305 = vmatpush.msra.mxu0 %v110
    %306 = vmatpush.msra.mxu0 %v109
    %307 = vmatmul.f32.gmra.mxu0 %v280
    %v308 = vpop.f32.mrf.mxu0
    %v309 = vadd.f32 %v278, %v308
    %310 = vmatmul.f32.gmra.mxu0 %v283
    %v311 = vpop.f32.mrf.mxu0
    %v312 = vadd.f32 %v278, %v311
    %313 = vmatmul.f32.gmra.mxu0 %v286
    %v314 = vpop.f32.mrf.mxu0
    %v315 = vadd.f32 %v278, %v314
    %316 = vmatmul.f32.gmra.mxu0 %v289
    %v317 = vpop.f32.mrf.mxu0
    %v318 = vadd.f32 %v278, %v317
    %319 = vdwg.mxu0
    %320 = vmatpush.msra.mxu0 0.0
    %321 = vmatpush.msra.mxu0 0.0
    %322 = vmatpush.msra.mxu0 0.0
    %323 = vmatpush.msra.mxu0 0.0
    %324 = vmatpush.msra.mxu0 0.0
    %325 = vmatpush.msra.mxu0 0.0
    %326 = vmatpush.msra.mxu0 0.0
    %327 = vmatpush.msra.mxu0 0.0
    %328 = vmatpush.msra.mxu0 0.0
    %329 = vmatpush.msra.mxu0 0.0
    %330 = vmatpush.msra.mxu0 0.0
    %331 = vmatpush.msra.mxu0 0.0
    %332 = vmatpush.msra.mxu0 %v318
    %333 = vmatpush.msra.mxu0 %v315
    %334 = vmatpush.msra.mxu0 %v312
    %335 = vmatpush.msra.mxu0 %v309
    %336 = vmatmul.f32.gmra.mxu0 %v194
    %v337 = vpop.f32.mrf.mxu0
    %v338 = vadd.f32 0.0, %v337
    %339 = vdwg.mxu0
    %v340 = vmul.f32 %v309, %v309
    %v341 = vmul.f32 %v312, %v312
    %v342 = vmul.f32 %v315, %v315
    %v343 = vmul.f32 %v318, %v318
    %344 = vmatpush.msra.mxu0 0.0
    %345 = vmatpush.msra.mxu0 0.0
    %346 = vmatpush.msra.mxu0 0.0
    %347 = vmatpush.msra.mxu0 0.0
    %348 = vmatpush.msra.mxu0 0.0
    %349 = vmatpush.msra.mxu0 0.0
    %350 = vmatpush.msra.mxu0 0.0
    %351 = vmatpush.msra.mxu0 0.0
    %352 = vmatpush.msra.mxu0 0.0
    %353 = vmatpush.msra.mxu0 0.0
    %354 = vmatpush.msra.mxu0 0.0
    %355 = vmatpush.msra.mxu0 0.0
    %356 = vmatpush.msra.mxu0 %v343
    %357 = vmatpush.msra.mxu0 %v342
    %358 = vmatpush.msra.mxu0 %v341
    %359 = vmatpush.msra.mxu0 %v340
    %360 = vmatmul.f32.gmra.mxu0 %v194
    %v361 = vpop.f32.mrf.mxu0
    %v362 = vadd.f32 0.0, %v361
    %363 = vdwg.mxu0
    %v364 = vmul.f32 %v338, %v338
    %v365 = vsub.f32 %v362, %v364
    %v366 = vmax.f32 %v365, 0.0
    %v367 = vperm.slane %v338, 0
    %v368 = vsub.f32 %v309, %v367
    %v369 = vsub.f32 %v312, %v367
    %v370 = vsub.f32 %v315, %v367
    %v371 = vsub.f32 %v318, %v367
    %v372 = vadd.f32 %v366, 1e-05
    %v373 = vrsqrt.pop %v372
    %v374 = vmul.f32 %v373, %v372
    %v375 = vmul.f32 %v374, %v373
    %v376 = vmul.f32 0.5, %v375
    %v377 = vsub.f32 1.5, %v376
    %v378 = vmul.f32 %v373, %v377
    %vm379 = vweird.f32 %v372
    %vm380 = vweird.f32 %v373
    %vm381 = vmor %vm379, %vm380
    %v382 = vsel %vm381, %v373, %v378
    %v383 = vperm.slane %v382, 0
    %v384 = vmul.f32 %v368, %v383
    %v385 = vmul.f32 %v369, %v383
    %v386 = vmul.f32 %v370, %v383
    %v387 = vmul.f32 %v371, %v383
    %v388 = vperm.slane %v118, 4
    %v389 = vmul.f32 %v384, %v388
    %v390 = vmul.f32 %v385, %v388
    %v391 = vmul.f32 %v386, %v388
    %v392 = vmul.f32 %v387, %v388
    %v393 = vperm.slane %v118, 5
    %v394 = vadd.f32 %v389, %v393
    %v395 = vadd.f32 %v390, %v393
    %v396 = vadd.f32 %v391, %v393
    %v397 = vadd.f32 %v392, %v393
    %v398 = vsel %vm193, %v48, 0
    %400 = vmatpush.msra.mxu0 0.0
    %401 = vmatpush.msra.mxu0 0.0
    %402 = vmatpush.msra.mxu0 0.0
    %403 = vmatpush.msra.mxu0 0.0
    %404 = vmatpush.msra.mxu0 0.0
    %405 = vmatpush.msra.mxu0 0.0
    %406 = vmatpush.msra.mxu0 0.0
    %407 = vmatpush.msra.mxu0 0.0
    %408 = vmatpush.msra.mxu0 0.0
    %409 = vmatpush.msra.mxu0 0.0
    %410 = vmatpush.msra.mxu0 0.0
    %411 = vmatpush.msra.mxu0 0.0
    %412 = vmatpush.msra.mxu0 %v397
    %413 = vmatpush.msra.mxu0 %v396
    %414 = vmatpush.msra.mxu0 %v395
    %415 = vmatpush.msra.mxu0 %v394
    %416 = vmatmul.f32.gmra.mxu0 %v398
    %v417 = vpop.f32.mrf.mxu0
    %v418 = vadd.f32 0.0, %v417
    %419 = vdwg.mxu0
    %v421 = vsel %vm193, %v418, 0
    %423 = vmatpush.msra.mxu0 0.0
    %424 = vmatpush.msra.mxu0 0.0
    %425 = vmatpush.msra.mxu0 0.0
    %426 = vmatpush.msra.mxu0 0.0
    %427 = vmatpush.msra.mxu0 0.0
    %428 = vmatpush.msra.mxu0 0.0
    %429 = vmatpush.msra.mxu0 0.0
    %430 = vmatpush.msra.mxu0 0.0
    %431 = vmatpush.msra.mxu0 0.0
    %432 = vmatpush.msra.mxu0 0.0
    %433 = vmatpush.msra.mxu0 0.0
    %434 = vmatpush.msra.mxu0 0.0
    %435 = vmatpush.msra.mxu0 %v116
    %436 = vmatpush.msra.mxu0 %v115
    %437 = vmatpush.msra.mxu0 %v114
    %438 = vmatpush.msra.mxu0 %v113
    %439 = vmatmul.f32.gmra.mxu0 %v421
    %v440 = vpop.f32.mrf.mxu0
    %v441 = vadd.f32 0.0, %v440
    %442 = vdwg.mxu0
    %v443 = vmax.f32 %v441, 0.0
    %vm444 = vcmask 15360
    %v446 = vsel %vm444, %v443, 0
    %vm448 = vcmask 1041408
    %v450 = vsel %vm448, %v117, 0
    %452 = vmatpush.msra.mxu0 0.0
    %453 = vmatpush.msra.mxu0 0.0
    %454 = vmatpush.msra.mxu0 0.0
    %455 = vmatpush.msra.mxu0 0.0
    %456 = vmatpush.msra.mxu0 0.0
    %457 = vmatpush.msra.mxu0 0.0
    %458 = vmatpush.msra.mxu0 0.0
    %459 = vmatpush.msra.mxu0 0.0
    %460 = vmatpush.msra.mxu0 0.0
    %461 = vmatpush.msra.mxu0 0.0
    %462 = vmatpush.msra.mxu0 0.0
    %463 = vmatpush.msra.mxu0 0.0
    %464 = vmatpush.msra.mxu0 0.0
    %465 = vmatpush.msra.mxu0 0.0
    %466 = vmatpush.msra.mxu0 0.0
    %467 = vmatpush.msra.mxu0 %v450
    %468 = vmatmul.f32.gmra.mxu0 %v446
    %v469 = vpop.f32.mrf.mxu0
    %v470 = vadd.f32 0.0, %v469
    %471 = vdwg.mxu0
    %v472 = vxor.u32 %v470, 2147483648
    %v473 = vmul.f32 %v472, 1.442695
    %v474 = vpow.pop %v473
    %v475 = vadd.f32 %v474, 1.0
    %v476 = vrcp.pop %v475
    %v477 = vmul.f32 %v475, %v476
    %v478 = vsub.f32 1.0, %v477
    %v479 = vmul.f32 %v476, %v478
    %v480 = vadd.f32 %v476, %v479
    %vm481 = vweird.f32 %v475
    %vm482 = vweird.f32 %v476
    %vm483 = vmor %vm481, %vm482
    %v484 = vsel %vm483, %v476, %v480
    %v485 = vand.u32 2147483647, %v475
    %vm486 = vcmp.eq.f32.partialorder %v485, 8.507059e+37
    %v487 = vand.u32 %v475, 2147483648
    %v488 = vor.u32 1.1754944e-38, %v487
    %v489 = vsel %vm486, %v488, %v484
    %v490 = vmul.f32 1.0, %v489
    %v492 = vsel %vm444, %v49, 0
    %v495 = vsel %vm444, %v50, 0
    %v498 = vsel %vm444, %v51, 0
    %v501 = vsel %vm444, %v52, 0
    %v504 = vsel %vm448, %v490, 0
    %506 = vmatpush.msra.mxu0 0.0
    %507 = vmatpush.msra.mxu0 0.0
    %508 = vmatpush.msra.mxu0 0.0
    %509 = vmatpush.msra.mxu0 0.0
    %510 = vmatpush.msra.mxu0 0.0
    %511 = vmatpush.msra.mxu0 0.0
    %512 = vmatpush.msra.mxu0 0.0
    %513 = vmatpush.msra.mxu0 0.0
    %514 = vmatpush.msra.mxu0 0.0
    %515 = vmatpush.msra.mxu0 0.0
    %516 = vmatpush.msra.mxu0 0.0
    %517 = vmatpush.msra.mxu0 0.0
    %518 = vmatpush.msra.mxu0 0.0
    %519 = vmatpush.msra.mxu0 0.0
    %520 = vmatpush.msra.mxu0 0.0
    %521 = vmatpush.msra.mxu0 %v504
    %522 = vmatmul.f32.gmra.mxu0 %v492
    %v523 = vpop.f32.mrf.mxu0
    %v524 = vadd.f32 0.0, %v523
    %525 = vmatmul.f32.gmra.mxu0 %v495
    %v526 = vpop.f32.mrf.mxu0
    %v527 = vadd.f32 0.0, %v526
    %528 = vmatmul.f32.gmra.mxu0 %v498
    %v529 = vpop.f32.mrf.mxu0
    %v530 = vadd.f32 0.0, %v529
    %531 = vmatmul.f32.gmra.mxu0 %v501
    %v532 = vpop.f32.mrf.mxu0
    %v533 = vadd.f32 0.0, %v532
    %534 = vdwg.mxu0
    %v535 = vmul.f32 %v394, %v524
    %v536 = vmul.f32 %v395, %v527
    %v537 = vmul.f32 %v396, %v530
    %v538 = vmul.f32 %v397, %v533
    %539 = vmatpush.msra.mxu0 %v76
    %540 = vmatpush.msra.mxu0 %v75
    %541 = vmatpush.msra.mxu0 %v74
    %542 = vmatpush.msra.mxu0 %v73
    %543 = vmatpush.msra.mxu0 %v72
    %544 = vmatpush.msra.mxu0 %v71
    %545 = vmatpush.msra.mxu0 %v70
    %546 = vmatpush.msra.mxu0 %v69
    %547 = vmatpush.msra.mxu0 %v68
    %548 = vmatpush.msra.mxu0 %v67
    %549 = vmatpush.msra.mxu0 %v66
    %550 = vmatpush.msra.mxu0 %v65
    %551 = vmatpush.msra.mxu0 %v64
    %552 = vmatpush.msra.mxu0 %v63
    %553 = vmatpush.msra.mxu0 %v62
    %554 = vmatpush.msra.mxu0 %v61
    %555 = vmatmul.f32.gmra.mxu0 %v53
    %v556 = vpop.f32.mrf.mxu0
    %v557 = vadd.f32 0.0, %v556
    %558 = vmatmul.f32.gmra.mxu0 %v55
    %v559 = vpop.f32.mrf.mxu0
    %v560 = vadd.f32 0.0, %v559
    %561 = vmatmul.f32.gmra.mxu0 %v57
    %v562 = vpop.f32.mrf.mxu0
    %v563 = vadd.f32 0.0, %v562
    %564 = vmatmul.f32.gmra.mxu0 %v59
    %v565 = vpop.f32.mrf.mxu0
    %v566 = vadd.f32 0.0, %v565
    %567 = vdwg.mxu0
    %568 = vmatpush.msra.mxu0 0.0
    %569 = vmatpush.msra.mxu0 0.0
    %570 = vmatpush.msra.mxu0 0.0
    %571 = vmatpush.msra.mxu0 0.0
    %572 = vmatpush.msra.mxu0 0.0
    %573 = vmatpush.msra.mxu0 0.0
    %574 = vmatpush.msra.mxu0 0.0
    %575 = vmatpush.msra.mxu0 0.0
    %576 = vmatpush.msra.mxu0 %v84
    %577 = vmatpush.msra.mxu0 %v83
    %578 = vmatpush.msra.mxu0 %v82
    %579 = vmatpush.msra.mxu0 %v81
    %580 = vmatpush.msra.mxu0 %v80
    %581 = vmatpush.msra.mxu0 %v79
    %582 = vmatpush.msra.mxu0 %v78
    %583 = vmatpush.msra.mxu0 %v77
    %584 = vmatmul.f32.gmra.mxu0 %v122
    %v585 = vpop.f32.mrf.mxu0
    %v586 = vadd.f32 %v557, %v585
    %587 = vmatmul.f32.gmra.mxu0 %v125
    %v588 = vpop.f32.mrf.mxu0
    %v589 = vadd.f32 %v560, %v588
    %590 = vmatmul.f32.gmra.mxu0 %v128
    %v591 = vpop.f32.mrf.mxu0
    %v592 = vadd.f32 %v563, %v591
    %593 = vmatmul.f32.gmra.mxu0 %v131
    %v594 = vpop.f32.mrf.mxu0
    %v595 = vadd.f32 %v566, %v594
    %596 = vdwg.mxu0
    %597 = vmatpush.msra.mxu0 0.0
    %598 = vmatpush.msra.mxu0 0.0
    %599 = vmatpush.msra.mxu0 0.0
    %600 = vmatpush.msra.mxu0 0.0
    %601 = vmatpush.msra.mxu0 0.0
    %602 = vmatpush.msra.mxu0 0.0
    %603 = vmatpush.msra.mxu0 0.0
    %604 = vmatpush.msra.mxu0 0.0
    %605 = vmatpush.msra.mxu0 0.0
    %606 = vmatpush.msra.mxu0 0.0
    %607 = vmatpush.msra.mxu0 0.0
    %608 = vmatpush.msra.mxu0 0.0
    %609 = vmatpush.msra.mxu0 %v595
    %610 = vmatpush.msra.mxu0 %v592
    %611 = vmatpush.msra.mxu0 %v589
    %612 = vmatpush.msra.mxu0 %v586
    %613 = vmatmul.f32.gmra.mxu0 %v194
    %v614 = vpop.f32.mrf.mxu0
    %v615 = vadd.f32 0.0, %v614
    %616 = vdwg.mxu0
    %v617 = vmul.f32 %v586, %v586
    %v618 = vmul.f32 %v589, %v589
    %v619 = vmul.f32 %v592, %v592
    %v620 = vmul.f32 %v595, %v595
    %621 = vmatpush.msra.mxu0 0.0
    %622 = vmatpush.msra.mxu0 0.0
    %623 = vmatpush.msra.mxu0 0.0
    %624 = vmatpush.msra.mxu0 0.0
    %625 = vmatpush.msra.mxu0 0.0
    %626 = vmatpush.msra.mxu0 0.0
    %627 = vmatpush.msra.mxu0 0.0
    %628 = vmatpush.msra.mxu0 0.0
    %629 = vmatpush.msra.mxu0 0.0
    %630 = vmatpush.msra.mxu0 0.0
    %631 = vmatpush.msra.mxu0 0.0
    %632 = vmatpush.msra.mxu0 0.0
    %633 = vmatpush.msra.mxu0 %v620
    %634 = vmatpush.msra.mxu0 %v619
    %635 = vmatpush.msra.mxu0 %v618
    %636 = vmatpush.msra.mxu0 %v617
    %637 = vmatmul.f32.gmra.mxu0 %v194
    %v638 = vpop.f32.mrf.mxu0
    %v639 = vadd.f32 0.0, %v638
    %640 = vdwg.mxu0
    %v641 = vmul.f32 %v615, %v615
    %v642 = vsub.f32 %v639, %v641
    %v643 = vmax.f32 %v642, 0.0
    %v644 = vperm.slane %v615, 0
    %v645 = vsub.f32 %v586, %v644
    %v646 = vsub.f32 %v589, %v644
    %v647 = vsub.f32 %v592, %v644
    %v648 = vsub.f32 %v595, %v644
    %v649 = vadd.f32 %v643, 1e-05
    %v650 = vrsqrt.pop %v649
    %v651 = vmul.f32 %v650, %v649
    %v652 = vmul.f32 %v651, %v650
    %v653 = vmul.f32 0.5, %v652
    %v654 = vsub.f32 1.5, %v653
    %v655 = vmul.f32 %v650, %v654
    %vm656 = vweird.f32 %v649
    %vm657 = vweird.f32 %v650
    %vm658 = vmor %vm656, %vm657
    %v659 = vsel %vm658, %v650, %v655
    %v660 = vperm.slane %v659, 0
    %v661 = vmul.f32 %v645, %v660
    %v662 = vmul.f32 %v646, %v660
    %v663 = vmul.f32 %v647, %v660
    %v664 = vmul.f32 %v648, %v660
    %v665 = vperm.slane %v118, 6
    %v666 = vmul.f32 %v661, %v665
    %v667 = vmul.f32 %v662, %v665
    %v668 = vmul.f32 %v663, %v665
    %v669 = vmul.f32 %v664, %v665
    %v670 = vperm.slane %v118, 7
    %v671 = vadd.f32 %v666, %v670
    %v672 = vadd.f32 %v667, %v670
    %v673 = vadd.f32 %v668, %v670
    %v674 = vadd.f32 %v669, %v670
    %v675 = vadd.f32 %v535, %v671
    %v676 = vadd.f32 %v536, %v672
    %v677 = vadd.f32 %v537, %v673
    %v678 = vadd.f32 %v538, %v674
    %v679 = vmax.f32 %v675, 0.0
    %v680 = vmax.f32 %v676, 0.0
    %v681 = vmax.f32 %v677, 0.0
    %v682 = vmax.f32 %v678, 0.0
    %v683 = vld [vmem:[%s9] sm:$0xff]
    %v684 = vld [vmem:[%s9 + $0x8] sm:$0xff]
    %v685 = vld [vmem:[%s9 + $0x10] sm:$0xff]
    %v686 = vld [vmem:[%s9 + $0x18] sm:$0xff]
    %v687 = vld [vmem:[%s10] sm:$0xff]
    %v688 = vld [vmem:[%s10 + $0x8] sm:$0xff]
    %v689 = vld [vmem:[%s10 + $0x10] sm:$0xff]
    %v690 = vld [vmem:[%s10 + $0x18] sm:$0xff]
    %v691 = vld [vmem:[%s11] sm:$0xff]
    %v692 = vld [vmem:[%s11 + $0x8] sm:$0xff]
    %v693 = vld [vmem:[%s11 + $0x10] sm:$0xff]
    %v694 = vld [vmem:[%s11 + $0x18] sm:$0xff]
    %v695 = vld [vmem:[%s12] sm:$0x3]
    %v696 = vld [vmem:[%s13] sm:$0x3f]
    %v697 = vperm.slane %v696, 0
    %v699 = vsel %vm193, %v679, 0
    %v702 = vsel %vm193, %v680, 0
    %v705 = vsel %vm193, %v681, 0
    %v708 = vsel %vm193, %v682, 0
    %710 = vmatpush.msra.mxu0 0.0
    %711 = vmatpush.msra.mxu0 0.0
    %712 = vmatpush.msra.mxu0 0.0
    %713 = vmatpush.msra.mxu0 0.0
    %714 = vmatpush.msra.mxu0 0.0
    %715 = vmatpush.msra.mxu0 0.0
    %716 = vmatpush.msra.mxu0 0.0
    %717 = vmatpush.msra.mxu0 0.0
    %718 = vmatpush.msra.mxu0 0.0
    %719 = vmatpush.msra.mxu0 0.0
    %720 = vmatpush.msra.mxu0 0.0
    %721 = vmatpush.msra.mxu0 0.0
    %722 = vmatpush.msra.mxu0 %v686
    %723 = vmatpush.msra.mxu0 %v685
    %724 = vmatpush.msra.mxu0 %v684
    %725 = vmatpush.msra.mxu0 %v683
    %726 = vmatmul.f32.gmra.mxu0 %v699
    %v727 = vpop.f32.mrf.mxu0
    %v728 = vadd.f32 %v697, %v727
    %729 = vmatmul.f32.gmra.mxu0 %v702
    %v730 = vpop.f32.mrf.mxu0
    %v731 = vadd.f32 %v697, %v730
    %732 = vmatmul.f32.gmra.mxu0 %v705
    %v733 = vpop.f32.mrf.mxu0
    %v734 = vadd.f32 %v697, %v733
    %735 = vmatmul.f32.gmra.mxu0 %v708
    %v736 = vpop.f32.mrf.mxu0
    %v737 = vadd.f32 %v697, %v736
    %738 = vdwg.mxu0
    %739 = vmatpush.msra.mxu0 0.0
    %740 = vmatpush.msra.mxu0 0.0
    %741 = vmatpush.msra.mxu0 0.0
    %742 = vmatpush.msra.mxu0 0.0
    %743 = vmatpush.msra.mxu0 0.0
    %744 = vmatpush.msra.mxu0 0.0
    %745 = vmatpush.msra.mxu0 0.0
    %746 = vmatpush.msra.mxu0 0.0
    %747 = vmatpush.msra.mxu0 0.0
    %748 = vmatpush.msra.mxu0 0.0
    %749 = vmatpush.msra.mxu0 0.0
    %750 = vmatpush.msra.mxu0 0.0
    %751 = vmatpush.msra.mxu0 %v737
    %752 = vmatpush.msra.mxu0 %v734
    %753 = vmatpush.msra.mxu0 %v731
    %754 = vmatpush.msra.mxu0 %v728
    %755 = vmatmul.f32.gmra.mxu0 %v194
    %v756 = vpop.f32.mrf.mxu0
    %v757 = vadd.f32 0.0, %v756
    %758 = vdwg.mxu0
    %v759 = vmul.f32 %v728, %v728
    %v760 = vmul.f32 %v731, %v731
    %v761 = vmul.f32 %v734, %v734
    %v762 = vmul.f32 %v737, %v737
    %763 = vmatpush.msra.mxu0 0.0
    %764 = vmatpush.msra.mxu0 0.0
    %765 = vmatpush.msra.mxu0 0.0
    %766 = vmatpush.msra.mxu0 0.0
    %767 = vmatpush.msra.mxu0 0.0
    %768 = vmatpush.msra.mxu0 0.0
    %769 = vmatpush.msra.mxu0 0.0
    %770 = vmatpush.msra.mxu0 0.0
    %771 = vmatpush.msra.mxu0 0.0
    %772 = vmatpush.msra.mxu0 0.0
    %773 = vmatpush.msra.mxu0 0.0
    %774 = vmatpush.msra.mxu0 0.0
    %775 = vmatpush.msra.mxu0 %v762
    %776 = vmatpush.msra.mxu0 %v761
    %777 = vmatpush.msra.mxu0 %v760
    %778 = vmatpush.msra.mxu0 %v759
    %779 = vmatmul.f32.gmra.mxu0 %v194
    %v780 = vpop.f32.mrf.mxu0
    %v781 = vadd.f32 0.0, %v780
    %782 = vdwg.mxu0
    %v783 = vmul.f32 %v757, %v757
    %v784 = vsub.f32 %v781, %v783
    %v785 = vmax.f32 %v784, 0.0
    %v786 = vperm.slane %v757, 0
    %v787 = vsub.f32 %v728, %v786
    %v788 = vsub.f32 %v731, %v786
    %v789 = vsub.f32 %v734, %v786
    %v790 = vsub.f32 %v737, %v786
    %v791 = vadd.f32 %v785, 1e-05
    %v792 = vrsqrt.pop %v791
    %v793 = vmul.f32 %v792, %v791
    %v794 = vmul.f32 %v793, %v792
    %v795 = vmul.f32 0.5, %v794
    %v796 = vsub.f32 1.5, %v795
    %v797 = vmul.f32 %v792, %v796
    %vm798 = vweird.f32 %v791
    %vm799 = vweird.f32 %v792
    %vm800 = vmor %vm798, %vm799
    %v801 = vsel %vm800, %v792, %v797
    %v802 = vperm.slane %v801, 0
    %v803 = vmul.f32 %v787, %v802
    %v804 = vmul.f32 %v788, %v802
    %v805 = vmul.f32 %v789, %v802
    %v806 = vmul.f32 %v790, %v802
    %v807 = vperm.slane %v696, 1
    %v808 = vmul.f32 %v803, %v807
    %v809 = vmul.f32 %v804, %v807
    %v810 = vmul.f32 %v805, %v807
    %v811 = vmul.f32 %v806, %v807
    %v812 = vperm.slane %v696, 2
    %v813 = vadd.f32 %v808, %v812
    %v814 = vadd.f32 %v809, %v812
    %v815 = vadd.f32 %v810, %v812
    %v816 = vadd.f32 %v811, %v812
    %v817 = vmax.f32 %v813, 0.0
    %v818 = vmax.f32 %v814, 0.0
    %v819 = vmax.f32 %v815, 0.0
    %v820 = vmax.f32 %v816, 0.0
    %v821 = vperm.slane %v696, 3
    %v823 = vsel %vm193, %v817, 0
    %v826 = vsel %vm193, %v818, 0
    %v829 = vsel %vm193, %v819, 0
    %v832 = vsel %vm193, %v820, 0
    %834 = vmatpush.msra.mxu0 0.0
    %835 = vmatpush.msra.mxu0 0.0
    %836 = vmatpush.msra.mxu0 0.0
    %837 = vmatpush.msra.mxu0 0.0
    %838 = vmatpush.msra.mxu0 0.0
    %839 = vmatpush.msra.mxu0 0.0
    %840 = vmatpush.msra.mxu0 0.0
    %841 = vmatpush.msra.mxu0 0.0
    %842 = vmatpush.msra.mxu0 0.0
    %843 = vmatpush.msra.mxu0 0.0
    %844 = vmatpush.msra.mxu0 0.0
    %845 = vmatpush.msra.mxu0 0.0
    %846 = vmatpush.msra.mxu0 %v690
    %847 = vmatpush.msra.mxu0 %v689
    %848 = vmatpush.msra.mxu0 %v688
    %849 = vmatpush.msra.mxu0 %v687
    %850 = vmatmul.f32.gmra.mxu0 %v823
    %v851 = vpop.f32.mrf.mxu0
    %v852 = vadd.f32 %v821, %v851
    %853 = vmatmul.f32.gmra.mxu0 %v826
    %v854 = vpop.f32.mrf.mxu0
    %v855 = vadd.f32 %v821, %v854
    %856 = vmatmul.f32.gmra.mxu0 %v829
    %v857 = vpop.f32.mrf.mxu0
    %v858 = vadd.f32 %v821, %v857
    %859 = vmatmul.f32.gmra.mxu0 %v832
    %v860 = vpop.f32.mrf.mxu0
    %v861 = vadd.f32 %v821, %v860
    %862 = vdwg.mxu0
    %863 = vmatpush.msra.mxu0 0.0
    %864 = vmatpush.msra.mxu0 0.0
    %865 = vmatpush.msra.mxu0 0.0
    %866 = vmatpush.msra.mxu0 0.0
    %867 = vmatpush.msra.mxu0 0.0
    %868 = vmatpush.msra.mxu0 0.0
    %869 = vmatpush.msra.mxu0 0.0
    %870 = vmatpush.msra.mxu0 0.0
    %871 = vmatpush.msra.mxu0 0.0
    %872 = vmatpush.msra.mxu0 0.0
    %873 = vmatpush.msra.mxu0 0.0
    %874 = vmatpush.msra.mxu0 0.0
    %875 = vmatpush.msra.mxu0 %v861
    %876 = vmatpush.msra.mxu0 %v858
    %877 = vmatpush.msra.mxu0 %v855
    %878 = vmatpush.msra.mxu0 %v852
    %879 = vmatmul.f32.gmra.mxu0 %v194
    %v880 = vpop.f32.mrf.mxu0
    %v881 = vadd.f32 0.0, %v880
    %882 = vdwg.mxu0
    %v883 = vmul.f32 %v852, %v852
    %v884 = vmul.f32 %v855, %v855
    %v885 = vmul.f32 %v858, %v858
    %v886 = vmul.f32 %v861, %v861
    %887 = vmatpush.msra.mxu0 0.0
    %888 = vmatpush.msra.mxu0 0.0
    %889 = vmatpush.msra.mxu0 0.0
    %890 = vmatpush.msra.mxu0 0.0
    %891 = vmatpush.msra.mxu0 0.0
    %892 = vmatpush.msra.mxu0 0.0
    %893 = vmatpush.msra.mxu0 0.0
    %894 = vmatpush.msra.mxu0 0.0
    %895 = vmatpush.msra.mxu0 0.0
    %896 = vmatpush.msra.mxu0 0.0
    %897 = vmatpush.msra.mxu0 0.0
    %898 = vmatpush.msra.mxu0 0.0
    %899 = vmatpush.msra.mxu0 %v886
    %900 = vmatpush.msra.mxu0 %v885
    %901 = vmatpush.msra.mxu0 %v884
    %902 = vmatpush.msra.mxu0 %v883
    %903 = vmatmul.f32.gmra.mxu0 %v194
    %v904 = vpop.f32.mrf.mxu0
    %v905 = vadd.f32 0.0, %v904
    %906 = vdwg.mxu0
    %v907 = vmul.f32 %v881, %v881
    %v908 = vsub.f32 %v905, %v907
    %v909 = vmax.f32 %v908, 0.0
    %v910 = vperm.slane %v881, 0
    %v911 = vsub.f32 %v852, %v910
    %v912 = vsub.f32 %v855, %v910
    %v913 = vsub.f32 %v858, %v910
    %v914 = vsub.f32 %v861, %v910
    %v915 = vadd.f32 %v909, 1e-05
    %v916 = vrsqrt.pop %v915
    %v917 = vmul.f32 %v916, %v915
    %v918 = vmul.f32 %v917, %v916
    %v919 = vmul.f32 0.5, %v918
    %v920 = vsub.f32 1.5, %v919
    %v921 = vmul.f32 %v916, %v920
    %vm922 = vweird.f32 %v915
    %vm923 = vweird.f32 %v916
    %vm924 = vmor %vm922, %vm923
    %v925 = vsel %vm924, %v916, %v921
    %v926 = vperm.slane %v925, 0
    %v927 = vmul.f32 %v911, %v926
    %v928 = vmul.f32 %v912, %v926
    %v929 = vmul.f32 %v913, %v926
    %v930 = vmul.f32 %v914, %v926
    %v931 = vperm.slane %v696, 4
    %v932 = vmul.f32 %v927, %v931
    %v933 = vmul.f32 %v928, %v931
    %v934 = vmul.f32 %v929, %v931
    %v935 = vmul.f32 %v930, %v931
    %v936 = vperm.slane %v696, 5
    %v937 = vadd.f32 %v932, %v936
    %v938 = vadd.f32 %v933, %v936
    %v939 = vadd.f32 %v934, %v936
    %v940 = vadd.f32 %v935, %v936
    %941 = vmatpush.msra.mxu0 0.0
    %942 = vmatpush.msra.mxu0 0.0
    %943 = vmatpush.msra.mxu0 0.0
    %944 = vmatpush.msra.mxu0 0.0
    %945 = vmatpush.msra.mxu0 0.0
    %946 = vmatpush.msra.mxu0 0.0
    %947 = vmatpush.msra.mxu0 0.0
    %948 = vmatpush.msra.mxu0 0.0
    %949 = vmatpush.msra.mxu0 0.0
    %950 = vmatpush.msra.mxu0 0.0
    %951 = vmatpush.msra.mxu0 0.0
    %952 = vmatpush.msra.mxu0 0.0
    %953 = vmatpush.msra.mxu0 %v940
    %954 = vmatpush.msra.mxu0 %v939
    %955 = vmatpush.msra.mxu0 %v938
    %956 = vmatpush.msra.mxu0 %v937
    %957 = vmatmul.f32.gmra.mxu0 %v398
    %v958 = vpop.f32.mrf.mxu0
    %v959 = vadd.f32 0.0, %v958
    %960 = vdwg.mxu0
    %v962 = vsel %vm193, %v959, 0
    %964 = vmatpush.msra.mxu0 0.0
    %965 = vmatpush.msra.mxu0 0.0
    %966 = vmatpush.msra.mxu0 0.0
    %967 = vmatpush.msra.mxu0 0.0
    %968 = vmatpush.msra.mxu0 0.0
    %969 = vmatpush.msra.mxu0 0.0
    %970 = vmatpush.msra.mxu0 0.0
    %971 = vmatpush.msra.mxu0 0.0
    %972 = vmatpush.msra.mxu0 0.0
    %973 = vmatpush.msra.mxu0 0.0
    %974 = vmatpush.msra.mxu0 0.0
    %975 = vmatpush.msra.mxu0 0.0
    %976 = vmatpush.msra.mxu0 %v694
    %977 = vmatpush.msra.mxu0 %v693
    %978 = vmatpush.msra.mxu0 %v692
    %979 = vmatpush.msra.mxu0 %v691
    %980 = vmatmul.f32.gmra.mxu0 %v962
    %v981 = vpop.f32.mrf.mxu0
    %v982 = vadd.f32 0.0, %v981
    %983 = vdwg.mxu0
    %v984 = vmax.f32 %v982, 0.0
    %v986 = vsel %vm444, %v984, 0
    %v989 = vsel %vm448, %v695, 0
    %991 = vmatpush.msra.mxu0 0.0
    %992 = vmatpush.msra.mxu0 0.0
    %993 = vmatpush.msra.mxu0 0.0
    %994 = vmatpush.msra.mxu0 0.0
    %995 = vmatpush.msra.mxu0 0.0
    %996 = vmatpush.msra.mxu0 0.0
    %997 = vmatpush.msra.mxu0 0.0
    %998 = vmatpush.msra.mxu0 0.0
    %999 = vmatpush.msra.mxu0 0.0
    %1000 = vmatpush.msra.mxu0 0.0
    %1001 = vmatpush.msra.mxu0 0.0
    %1002 = vmatpush.msra.mxu0 0.0
    %1003 = vmatpush.msra.mxu0 0.0
    %1004 = vmatpush.msra.mxu0 0.0
    %1005 = vmatpush.msra.mxu0 0.0
    %1006 = vmatpush.msra.mxu0 %v989
    %1007 = vmatmul.f32.gmra.mxu0 %v986
    %v1008 = vpop.f32.mrf.mxu0
    %v1009 = vadd.f32 0.0, %v1008
    %1010 = vdwg.mxu0
    %v1011 = vxor.u32 %v1009, 2147483648
    %v1012 = vmul.f32 %v1011, 1.442695
    %v1013 = vpow.pop %v1012
    %v1014 = vadd.f32 %v1013, 1.0
    %v1015 = vrcp.pop %v1014
    %v1016 = vmul.f32 %v1014, %v1015
    %v1017 = vsub.f32 1.0, %v1016
    %v1018 = vmul.f32 %v1015, %v1017
    %v1019 = vadd.f32 %v1015, %v1018
    %vm1020 = vweird.f32 %v1014
    %vm1021 = vweird.f32 %v1015
    %vm1022 = vmor %vm1020, %vm1021
    %v1023 = vsel %vm1022, %v1015, %v1019
    %v1024 = vand.u32 2147483647, %v1014
    %vm1025 = vcmp.eq.f32.partialorder %v1024, 8.507059e+37
    %v1026 = vand.u32 %v1014, 2147483648
    %v1027 = vor.u32 1.1754944e-38, %v1026
    %v1028 = vsel %vm1025, %v1027, %v1023
    %v1029 = vmul.f32 1.0, %v1028
    %v1031 = vsel %vm448, %v1029, 0
    %1033 = vmatpush.msra.mxu0 0.0
    %1034 = vmatpush.msra.mxu0 0.0
    %1035 = vmatpush.msra.mxu0 0.0
    %1036 = vmatpush.msra.mxu0 0.0
    %1037 = vmatpush.msra.mxu0 0.0
    %1038 = vmatpush.msra.mxu0 0.0
    %1039 = vmatpush.msra.mxu0 0.0
    %1040 = vmatpush.msra.mxu0 0.0
    %1041 = vmatpush.msra.mxu0 0.0
    %1042 = vmatpush.msra.mxu0 0.0
    %1043 = vmatpush.msra.mxu0 0.0
    %1044 = vmatpush.msra.mxu0 0.0
    %1045 = vmatpush.msra.mxu0 0.0
    %1046 = vmatpush.msra.mxu0 0.0
    %1047 = vmatpush.msra.mxu0 0.0
    %1048 = vmatpush.msra.mxu0 %v1031
    %1049 = vmatmul.f32.gmra.mxu0 %v492
    %v1050 = vpop.f32.mrf.mxu0
    %v1051 = vadd.f32 0.0, %v1050
    %1052 = vmatmul.f32.gmra.mxu0 %v495
    %v1053 = vpop.f32.mrf.mxu0
    %v1054 = vadd.f32 0.0, %v1053
    %1055 = vmatmul.f32.gmra.mxu0 %v498
    %v1056 = vpop.f32.mrf.mxu0
    %v1057 = vadd.f32 0.0, %v1056
    %1058 = vmatmul.f32.gmra.mxu0 %v501
    %v1059 = vpop.f32.mrf.mxu0
    %v1060 = vadd.f32 0.0, %v1059
    %1061 = vdwg.mxu0
    %v1062 = vmul.f32 %v937, %v1051
    %v1063 = vmul.f32 %v938, %v1054
    %v1064 = vmul.f32 %v939, %v1057
    %v1065 = vmul.f32 %v940, %v1060
    %v1066 = vadd.f32 %v1062, %v679
    %v1067 = vadd.f32 %v1063, %v680
    %v1068 = vadd.f32 %v1064, %v681
    %v1069 = vadd.f32 %v1065, %v682
    %v1070 = vmax.f32 %v1066, 0.0
    %v1071 = vmax.f32 %v1067, 0.0
    %v1072 = vmax.f32 %v1068, 0.0
    %v1073 = vmax.f32 %v1069, 0.0
    %1074 = vst.msk [vmem:[#allocation2] sm:$0xff] %vm193, %v1070
    %1075 = vst.msk [vmem:[#allocation2 + $0x8] sm:$0xff] %vm193, %v1071
    %1076 = vst.msk [vmem:[#allocation2 + $0x10] sm:$0xff] %vm193, %v1072
    %1077 = vst.msk [vmem:[#allocation2 + $0x18] sm:$0xff] %vm193, %v1073
    // Predicated region
    $region58: #{se_resnet_forward.1} parent=1 // pred_check
      _
    $region59: #{se_resnet_forward.1} parent=1 // pred_check_branch
      %1079 = sbr.rel (0) target = $region61
    $region60: #{se_resnet_forward.1} parent=1 // pred_region
      %1081 = vsyncadd [#allocation3], 0
      %s1082 = sshll.u32 [#allocation2], 4
      %s1083 = int_to_ptr.vmem [resolvable:$true] %s1082
      %s1084 = sshll.u32 %s14, 4
      %s1085 = int_to_ptr.hbm [resolvable:$true] %s1084
      %1090 = dma.vmem_to_hbm [thread:$0]  %s1083, 512, %s1085, [#allocation3], 128, 128, 8
    $region61: #{se_resnet_forward.1} parent=1 // pred_fallthru
      _
    // Predicated region
    $region62: #{se_resnet_forward.1} parent=1 // pred_check
      _
    $region63: #{se_resnet_forward.1} parent=1 // pred_check_branch
      %1092 = sbr.rel (0) target = $region65
    $region64: #{se_resnet_forward.1} parent=1 // pred_region
      %1094 = dma.done [#allocation3], 512
    $region65: #{se_resnet_forward.1} parent=1 // pred_fallthru
      _
    %1095 = vsyncpa [#allocation3], 1

</llo_original>
